<compile_context>
chip_gen: v5e
topology: v5e:2x2
jax: 0.10.0
libtpu: 0.0.40
codegen_flags: <defaults>
</compile_context>

<pallas_src>
import jax
import jax.numpy as jnp
from jax.experimental import pallas as pl
from jax.experimental.pallas import tpu as pltpu

H = 200                  # hidden width (multiple of the 8-sublane f32 tile)
CHUNK = 8                # hidden rows per accumulation step (one sublane group)
N_CHUNKS = H // CHUNK    # 25
SLAB = 512               # batch lanes per inner-loop step (4 lane tiles)

TARGET_SLABS_PER_TILE = 32   # ~16K rows / grid step (amortizes ~600-cycle step cost)
MIN_SLABS_TO_SPLIT = 16      # force >=2 grid steps once batch >= ~8K rows (v7x: 2 TCs)


def _cdiv(a, b):
    return -(-a // b)


def _mlp_kernel(x_ref, w1_ref, b1_ref, w2_ref, b2_ref, o_ref):
    """One batch tile; batch on the lane axis.

    x_ref : (2, TILE_B)   inputs, batch on lanes (lane-dense)
    w1_ref: (H, 2)        layer-1 weights, hidden on sublanes
    b1_ref: (H, 1)        layer-1 bias
    w2_ref: (H, 1)        layer-2 weights
    b2_ref: (1, 1)        layer-2 bias
    o_ref : (1, TILE_B)   output, batch on lanes (lane-dense)
    """
    tile_b = x_ref.shape[1]
    n_slabs = tile_b // SLAB        # static; tile_b is a whole number of slabs

    @pl.loop(0, n_slabs)
    def _(s):
        off = pl.multiple_of(s * SLAB, SLAB)
        # Hoisted sublane-broadcast of the two input features for this slab.
        x0 = jnp.broadcast_to(x_ref[0:1, pl.ds(off, SLAB)], (CHUNK, SLAB))
        x1 = jnp.broadcast_to(x_ref[1:2, pl.ds(off, SLAB)], (CHUNK, SLAB))

        # Chunked accumulation over the hidden dim: only (8, SLAB) tiles are
        # ever live (no spill traffic); layer-2's dot folds into the
        # accumulator with a single XLU sublane-reduce at the end.
        acc = None
        for c in range(N_CHUNKS):          # static unroll -> straight-line code
            r = c * CHUNK
            w10 = w1_ref[r:r + CHUNK, 0:1]     # (8, 1)
            w11 = w1_ref[r:r + CHUNK, 1:2]     # (8, 1)
            b1c = b1_ref[r:r + CHUNK, :]       # (8, 1)
            w2c = w2_ref[r:r + CHUNK, :]       # (8, 1)
            h = jnp.maximum(w10 * x0 + w11 * x1 + b1c, 0.0)   # (8, SLAB)
            hw = h * w2c
            acc = hw if acc is None else acc + hw

        out = jnp.sum(acc, axis=0, keepdims=True) + b2_ref[...]  # (1, SLAB)
        o_ref[0:1, pl.ds(off, SLAB)] = out.astype(o_ref.dtype)


def _choose_tiling(batch):
    """Pick (tile_b, num_tiles): tiles are whole slabs, padding stays small,
    ~16K rows/tile, and >=2 grid steps once the batch is large enough."""
    n_slabs = _cdiv(batch, SLAB)
    num_tiles = _cdiv(n_slabs, TARGET_SLABS_PER_TILE)
    if n_slabs >= MIN_SLABS_TO_SPLIT:
        num_tiles = max(num_tiles, 2)
    slabs_per_tile = _cdiv(n_slabs, num_tiles)
    num_tiles = _cdiv(n_slabs, slabs_per_tile)
    return slabs_per_tile * SLAB, num_tiles


@jax.jit
def network_forward(pred, w1, b1, w2, b2):
    """Pallas equivalent of Network.forward (float32; see TODO above).

    pred: (B, >=2)  -- torch.cat((pred[:,0:1], pred[:,1:2]), dim=1) == pred[:, :2]
    w1: (2, 200)  b1: (1, 200)  w2: (200, 1)  b2: (1, 1)
    returns (B, 1) float32
    """
    B = pred.shape[0]
    tile_b, num_tiles = _choose_tiling(B)
    b_pad = tile_b * num_tiles

    # Batch on the 128-lane axis -> lane-dense input DMA and output store.
    x = pred[:, :2].astype(jnp.float32).T                # (2, B)
    if b_pad != B:
        x = jnp.pad(x, ((0, 0), (0, b_pad - B)))

    # Parameters rearranged for batch-on-lanes layout (hidden on sublanes).
    w1k = w1.astype(jnp.float32).T                       # (200, 2)
    b1k = b1.astype(jnp.float32).reshape(H, 1)           # (200, 1)
    w2k = w2.astype(jnp.float32).reshape(H, 1)           # (200, 1)
    b2k = b2.astype(jnp.float32).reshape(1, 1)           # (1, 1)

    cost = pl.CostEstimate(
        flops=int(b_pad) * 7 * H,                        # ~1.4 KFLOP per row
        transcendentals=0,
        bytes_accessed=int(b_pad) * 12 + (4 * H + 1) * 4,
    )

    out = pl.pallas_call(
        _mlp_kernel,
        out_shape=jax.ShapeDtypeStruct((1, b_pad), jnp.float32),
        grid=(num_tiles,),
        in_specs=[
            pl.BlockSpec((2, tile_b), lambda i: (0, i)),   # x: new tile per step
            pl.BlockSpec((H, 2), lambda i: (0, 0)),        # params stay resident
            pl.BlockSpec((H, 1), lambda i: (0, 0)),
            pl.BlockSpec((H, 1), lambda i: (0, 0)),
            pl.BlockSpec((1, 1), lambda i: (0, 0)),
        ],
        out_specs=pl.BlockSpec((1, tile_b), lambda i: (0, i)),  # lane-dense store
        compiler_params=pltpu.CompilerParams(
            dimension_semantics=("parallel",),             # shard steps across v7x TCs
        ),
        cost_estimate=cost,
    )(x, w1k, b1k, w2k, b2k)

    return out[0, :B].reshape(B, 1)


def init_params(key):
    """Deterministic init mirroring nn.Linear default (U[-1/sqrt(fan_in), +1/sqrt(fan_in)])."""
    k1, k2, k3, k4 = jax.random.split(key, 4)
    bound1 = 1.0 / jnp.sqrt(2.0)      # fan_in = 2
    bound2 = 1.0 / jnp.sqrt(200.0)    # fan_in = 200
    w1 = jax.random.uniform(k1, (2, 200), jnp.float32, -bound1, bound1)
    b1 = jax.random.uniform(k2, (1, 200), jnp.float32, -bound1, bound1)
    w2 = jax.random.uniform(k3, (200, 1), jnp.float32, -bound2, bound2)
    b2 = jax.random.uniform(k4, (1, 1), jnp.float32, -bound2, bound2)
    return w1, b1, w2, b2


if __name__ == "__main__":
    key = jax.random.PRNGKey(0)
    pkey, xkey = jax.random.split(key)
    w1, b1, w2, b2 = init_params(pkey)

    def ref_fwd(p):
        return jnp.maximum(p[:, :2] @ w1 + b1, 0.0) @ w2 + b2

    # Small batch (single slab, single grid step).
    pred_small = jax.random.normal(xkey, (8, 2), dtype=jnp.float32)
    out_small = jax.block_until_ready(network_forward(pred_small, w1, b1, w2, b2))
    assert out_small.shape == (8, 1)
    assert jnp.allclose(out_small, ref_fwd(pred_small), atol=1e-4, rtol=1e-4)

    # Batch that is not a slab multiple: exercises the multi-slab in-kernel
    # loop plus batch padding (2500 -> 2560).
    pred_mid = jax.random.normal(jax.random.PRNGKey(1), (2500, 2), dtype=jnp.float32)
    out_mid = jax.block_until_ready(network_forward(pred_mid, w1, b1, w2, b2))
    assert out_mid.shape == (2500, 1)
    assert jnp.allclose(out_mid, ref_fwd(pred_mid), atol=1e-4, rtol=1e-4)

    # Batch large enough to split into a >=2-step grid (both v7x TCs busy).
    pred_big = jax.random.normal(jax.random.PRNGKey(2), (9000, 2), dtype=jnp.float32)
    out_big = jax.block_until_ready(network_forward(pred_big, w1, b1, w2, b2))
    assert out_big.shape == (9000, 1)
    assert jnp.allclose(out_big, ref_fwd(pred_big), atol=1e-4, rtol=1e-4)

    print("KERNEL_OK")
</pallas_src>

<mosaic_0001>
module attributes {stable_mosaic.version = 11 : i64} {
  func.func @_mlp_kernel(%arg0: i32, %arg1: memref<2x512xf32, #tpu.memory_space<vmem>>, %arg2: memref<200x2xf32, #tpu.memory_space<vmem>>, %arg3: memref<200x1xf32, #tpu.memory_space<vmem>>, %arg4: memref<200x1xf32, #tpu.memory_space<vmem>>, %arg5: memref<1x1xf32, #tpu.memory_space<vmem>>, %arg6: memref<1x512xf32, #tpu.memory_space<vmem>>) attributes {dimension_semantics = [#tpu.dimension_semantics<parallel>], iteration_bounds = array<i64: 1>, scalar_prefetch = 0 : i64, scratch_operands = 0 : i64, tpu.core_type = #tpu.core_type<tc>, window_params = [{transform_indices = @transform_0, window_bounds = array<i64: 2, 512>}, {pipeline_mode = #tpu.pipeline_mode<synchronous>, transform_indices = @transform_1, window_bounds = array<i64: 200, 2>}, {pipeline_mode = #tpu.pipeline_mode<synchronous>, transform_indices = @transform_2, window_bounds = array<i64: 200, 1>}, {pipeline_mode = #tpu.pipeline_mode<synchronous>, transform_indices = @transform_3, window_bounds = array<i64: 200, 1>}, {pipeline_mode = #tpu.pipeline_mode<synchronous>, transform_indices = @transform_4, window_bounds = array<i64: 1, 1>}, {transform_indices = @transform_5, window_bounds = array<i64: 1, 512>}]} {
    %c0_i32 = arith.constant 0 : i32
    %c1_i32 = arith.constant 1 : i32
    %0 = arith.muli %c0_i32, %c1_i32 : i32
    %c0_i32_0 = arith.constant 0 : i32
    %1 = arith.addi %c0_i32_0, %0 : i32
    %c512_i32 = arith.constant 512 : i32
    %2 = arith.muli %1, %c512_i32 : i32
    %3 = tpu.assume_multiple %2, 512 : i32
    %c0 = arith.constant 0 : index
    %4 = arith.index_cast %3 : i32 to index
    %5 = vector.load %arg1[%c0, %4] : memref<2x512xf32, #tpu.memory_space<vmem>>, vector<1x512xf32>
    %6 = vector.shape_cast %5 : vector<1x512xf32> to vector<1x512xf32>
    %7 = vector.broadcast %6 : vector<1x512xf32> to vector<8x512xf32>
    %c1 = arith.constant 1 : index
    %8 = arith.index_cast %3 : i32 to index
    %9 = vector.load %arg1[%c1, %8] : memref<2x512xf32, #tpu.memory_space<vmem>>, vector<1x512xf32>
    %10 = vector.shape_cast %9 : vector<1x512xf32> to vector<1x512xf32>
    %11 = vector.broadcast %10 : vector<1x512xf32> to vector<8x512xf32>
    %c0_1 = arith.constant 0 : index
    %c0_2 = arith.constant 0 : index
    %12 = vector.load %arg2[%c0_1, %c0_2] : memref<200x2xf32, #tpu.memory_space<vmem>>, vector<8x1xf32>
    %c0_3 = arith.constant 0 : index
    %c1_4 = arith.constant 1 : index
    %13 = vector.load %arg2[%c0_3, %c1_4] : memref<200x2xf32, #tpu.memory_space<vmem>>, vector<8x1xf32>
    %c0_5 = arith.constant 0 : index
    %c0_6 = arith.constant 0 : index
    %14 = vector.load %arg3[%c0_5, %c0_6] : memref<200x1xf32, #tpu.memory_space<vmem>>, vector<8x1xf32>
    %c0_7 = arith.constant 0 : index
    %c0_8 = arith.constant 0 : index
    %15 = vector.load %arg4[%c0_7, %c0_8] : memref<200x1xf32, #tpu.memory_space<vmem>>, vector<8x1xf32>
    %16 = vector.broadcast %12 : vector<8x1xf32> to vector<8x512xf32>
    %17 = arith.mulf %16, %7 : vector<8x512xf32>
    %18 = vector.broadcast %13 : vector<8x1xf32> to vector<8x512xf32>
    %19 = arith.mulf %18, %11 : vector<8x512xf32>
    %20 = arith.addf %17, %19 : vector<8x512xf32>
    %21 = vector.broadcast %14 : vector<8x1xf32> to vector<8x512xf32>
    %22 = arith.addf %20, %21 : vector<8x512xf32>
    %cst = arith.constant 0.000000e+00 : f32
    %23 = vector.broadcast %cst : f32 to vector<8x512xf32>
    %24 = arith.maximumf %22, %23 : vector<8x512xf32>
    %25 = vector.broadcast %15 : vector<8x1xf32> to vector<8x512xf32>
    %26 = arith.mulf %24, %25 : vector<8x512xf32>
    %c8 = arith.constant 8 : index
    %c0_9 = arith.constant 0 : index
    %27 = vector.load %arg2[%c8, %c0_9] : memref<200x2xf32, #tpu.memory_space<vmem>>, vector<8x1xf32>
    %c8_10 = arith.constant 8 : index
    %c1_11 = arith.constant 1 : index
    %28 = vector.load %arg2[%c8_10, %c1_11] : memref<200x2xf32, #tpu.memory_space<vmem>>, vector<8x1xf32>
    %c8_12 = arith.constant 8 : index
    %c0_13 = arith.constant 0 : index
    %29 = vector.load %arg3[%c8_12, %c0_13] : memref<200x1xf32, #tpu.memory_space<vmem>>, vector<8x1xf32>
    %c8_14 = arith.constant 8 : index
    %c0_15 = arith.constant 0 : index
    %30 = vector.load %arg4[%c8_14, %c0_15] : memref<200x1xf32, #tpu.memory_space<vmem>>, vector<8x1xf32>
    %31 = vector.broadcast %27 : vector<8x1xf32> to vector<8x512xf32>
    %32 = arith.mulf %31, %7 : vector<8x512xf32>
    %33 = vector.broadcast %28 : vector<8x1xf32> to vector<8x512xf32>
    %34 = arith.mulf %33, %11 : vector<8x512xf32>
    %35 = arith.addf %32, %34 : vector<8x512xf32>
    %36 = vector.broadcast %29 : vector<8x1xf32> to vector<8x512xf32>
    %37 = arith.addf %35, %36 : vector<8x512xf32>
    %cst_16 = arith.constant 0.000000e+00 : f32
    %38 = vector.broadcast %cst_16 : f32 to vector<8x512xf32>
    %39 = arith.maximumf %37, %38 : vector<8x512xf32>
    %40 = vector.broadcast %30 : vector<8x1xf32> to vector<8x512xf32>
    %41 = arith.mulf %39, %40 : vector<8x512xf32>
    %42 = arith.addf %26, %41 : vector<8x512xf32>
    %c16 = arith.constant 16 : index
    %c0_17 = arith.constant 0 : index
    %43 = vector.load %arg2[%c16, %c0_17] : memref<200x2xf32, #tpu.memory_space<vmem>>, vector<8x1xf32>
    %c16_18 = arith.constant 16 : index
    %c1_19 = arith.constant 1 : index
    %44 = vector.load %arg2[%c16_18, %c1_19] : memref<200x2xf32, #tpu.memory_space<vmem>>, vector<8x1xf32>
    %c16_20 = arith.constant 16 : index
    %c0_21 = arith.constant 0 : index
    %45 = vector.load %arg3[%c16_20, %c0_21] : memref<200x1xf32, #tpu.memory_space<vmem>>, vector<8x1xf32>
    %c16_22 = arith.constant 16 : index
    %c0_23 = arith.constant 0 : index
    %46 = vector.load %arg4[%c16_22, %c0_23] : memref<200x1xf32, #tpu.memory_space<vmem>>, vector<8x1xf32>
    %47 = vector.broadcast %43 : vector<8x1xf32> to vector<8x512xf32>
    %48 = arith.mulf %47, %7 : vector<8x512xf32>
    %49 = vector.broadcast %44 : vector<8x1xf32> to vector<8x512xf32>
    %50 = arith.mulf %49, %11 : vector<8x512xf32>
    %51 = arith.addf %48, %50 : vector<8x512xf32>
    %52 = vector.broadcast %45 : vector<8x1xf32> to vector<8x512xf32>
    %53 = arith.addf %51, %52 : vector<8x512xf32>
    %cst_24 = arith.constant 0.000000e+00 : f32
    %54 = vector.broadcast %cst_24 : f32 to vector<8x512xf32>
    %55 = arith.maximumf %53, %54 : vector<8x512xf32>
    %56 = vector.broadcast %46 : vector<8x1xf32> to vector<8x512xf32>
    %57 = arith.mulf %55, %56 : vector<8x512xf32>
    %58 = arith.addf %42, %57 : vector<8x512xf32>
    %c24 = arith.constant 24 : index
    %c0_25 = arith.constant 0 : index
    %59 = vector.load %arg2[%c24, %c0_25] : memref<200x2xf32, #tpu.memory_space<vmem>>, vector<8x1xf32>
    %c24_26 = arith.constant 24 : index
    %c1_27 = arith.constant 1 : index
    %60 = vector.load %arg2[%c24_26, %c1_27] : memref<200x2xf32, #tpu.memory_space<vmem>>, vector<8x1xf32>
    %c24_28 = arith.constant 24 : index
    %c0_29 = arith.constant 0 : index
    %61 = vector.load %arg3[%c24_28, %c0_29] : memref<200x1xf32, #tpu.memory_space<vmem>>, vector<8x1xf32>
    %c24_30 = arith.constant 24 : index
    %c0_31 = arith.constant 0 : index
    %62 = vector.load %arg4[%c24_30, %c0_31] : memref<200x1xf32, #tpu.memory_space<vmem>>, vector<8x1xf32>
    %63 = vector.broadcast %59 : vector<8x1xf32> to vector<8x512xf32>
    %64 = arith.mulf %63, %7 : vector<8x512xf32>
    %65 = vector.broadcast %60 : vector<8x1xf32> to vector<8x512xf32>
    %66 = arith.mulf %65, %11 : vector<8x512xf32>
    %67 = arith.addf %64, %66 : vector<8x512xf32>
    %68 = vector.broadcast %61 : vector<8x1xf32> to vector<8x512xf32>
    %69 = arith.addf %67, %68 : vector<8x512xf32>
    %cst_32 = arith.constant 0.000000e+00 : f32
    %70 = vector.broadcast %cst_32 : f32 to vector<8x512xf32>
    %71 = arith.maximumf %69, %70 : vector<8x512xf32>
    %72 = vector.broadcast %62 : vector<8x1xf32> to vector<8x512xf32>
    %73 = arith.mulf %71, %72 : vector<8x512xf32>
    %74 = arith.addf %58, %73 : vector<8x512xf32>
    %c32 = arith.constant 32 : index
    %c0_33 = arith.constant 0 : index
    %75 = vector.load %arg2[%c32, %c0_33] : memref<200x2xf32, #tpu.memory_space<vmem>>, vector<8x1xf32>
    %c32_34 = arith.constant 32 : index
    %c1_35 = arith.constant 1 : index
    %76 = vector.load %arg2[%c32_34, %c1_35] : memref<200x2xf32, #tpu.memory_space<vmem>>, vector<8x1xf32>
    %c32_36 = arith.constant 32 : index
    %c0_37 = arith.constant 0 : index
    %77 = vector.load %arg3[%c32_36, %c0_37] : memref<200x1xf32, #tpu.memory_space<vmem>>, vector<8x1xf32>
    %c32_38 = arith.constant 32 : index
    %c0_39 = arith.constant 0 : index
    %78 = vector.load %arg4[%c32_38, %c0_39] : memref<200x1xf32, #tpu.memory_space<vmem>>, vector<8x1xf32>
    %79 = vector.broadcast %75 : vector<8x1xf32> to vector<8x512xf32>
    %80 = arith.mulf %79, %7 : vector<8x512xf32>
    %81 = vector.broadcast %76 : vector<8x1xf32> to vector<8x512xf32>
    %82 = arith.mulf %81, %11 : vector<8x512xf32>
    %83 = arith.addf %80, %82 : vector<8x512xf32>
    %84 = vector.broadcast %77 : vector<8x1xf32> to vector<8x512xf32>
    %85 = arith.addf %83, %84 : vector<8x512xf32>
    %cst_40 = arith.constant 0.000000e+00 : f32
    %86 = vector.broadcast %cst_40 : f32 to vector<8x512xf32>
    %87 = arith.maximumf %85, %86 : vector<8x512xf32>
    %88 = vector.broadcast %78 : vector<8x1xf32> to vector<8x512xf32>
    %89 = arith.mulf %87, %88 : vector<8x512xf32>
    %90 = arith.addf %74, %89 : vector<8x512xf32>
    %c40 = arith.constant 40 : index
    %c0_41 = arith.constant 0 : index
    %91 = vector.load %arg2[%c40, %c0_41] : memref<200x2xf32, #tpu.memory_space<vmem>>, vector<8x1xf32>
    %c40_42 = arith.constant 40 : index
    %c1_43 = arith.constant 1 : index
    %92 = vector.load %arg2[%c40_42, %c1_43] : memref<200x2xf32, #tpu.memory_space<vmem>>, vector<8x1xf32>
    %c40_44 = arith.constant 40 : index
    %c0_45 = arith.constant 0 : index
    %93 = vector.load %arg3[%c40_44, %c0_45] : memref<200x1xf32, #tpu.memory_space<vmem>>, vector<8x1xf32>
    %c40_46 = arith.constant 40 : index
    %c0_47 = arith.constant 0 : index
    %94 = vector.load %arg4[%c40_46, %c0_47] : memref<200x1xf32, #tpu.memory_space<vmem>>, vector<8x1xf32>
    %95 = vector.broadcast %91 : vector<8x1xf32> to vector<8x512xf32>
    %96 = arith.mulf %95, %7 : vector<8x512xf32>
    %97 = vector.broadcast %92 : vector<8x1xf32> to vector<8x512xf32>
    %98 = arith.mulf %97, %11 : vector<8x512xf32>
    %99 = arith.addf %96, %98 : vector<8x512xf32>
    %100 = vector.broadcast %93 : vector<8x1xf32> to vector<8x512xf32>
    %101 = arith.addf %99, %100 : vector<8x512xf32>
    %cst_48 = arith.constant 0.000000e+00 : f32
    %102 = vector.broadcast %cst_48 : f32 to vector<8x512xf32>
    %103 = arith.maximumf %101, %102 : vector<8x512xf32>
    %104 = vector.broadcast %94 : vector<8x1xf32> to vector<8x512xf32>
    %105 = arith.mulf %103, %104 : vector<8x512xf32>
    %106 = arith.addf %90, %105 : vector<8x512xf32>
    %c48 = arith.constant 48 : index
    %c0_49 = arith.constant 0 : index
    %107 = vector.load %arg2[%c48, %c0_49] : memref<200x2xf32, #tpu.memory_space<vmem>>, vector<8x1xf32>
    %c48_50 = arith.constant 48 : index
    %c1_51 = arith.constant 1 : index
    %108 = vector.load %arg2[%c48_50, %c1_51] : memref<200x2xf32, #tpu.memory_space<vmem>>, vector<8x1xf32>
    %c48_52 = arith.constant 48 : index
    %c0_53 = arith.constant 0 : index
    %109 = vector.load %arg3[%c48_52, %c0_53] : memref<200x1xf32, #tpu.memory_space<vmem>>, vector<8x1xf32>
    %c48_54 = arith.constant 48 : index
    %c0_55 = arith.constant 0 : index
    %110 = vector.load %arg4[%c48_54, %c0_55] : memref<200x1xf32, #tpu.memory_space<vmem>>, vector<8x1xf32>
    %111 = vector.broadcast %107 : vector<8x1xf32> to vector<8x512xf32>
    %112 = arith.mulf %111, %7 : vector<8x512xf32>
    %113 = vector.broadcast %108 : vector<8x1xf32> to vector<8x512xf32>
    %114 = arith.mulf %113, %11 : vector<8x512xf32>
    %115 = arith.addf %112, %114 : vector<8x512xf32>
    %116 = vector.broadcast %109 : vector<8x1xf32> to vector<8x512xf32>
    %117 = arith.addf %115, %116 : vector<8x512xf32>
    %cst_56 = arith.constant 0.000000e+00 : f32
    %118 = vector.broadcast %cst_56 : f32 to vector<8x512xf32>
    %119 = arith.maximumf %117, %118 : vector<8x512xf32>
    %120 = vector.broadcast %110 : vector<8x1xf32> to vector<8x512xf32>
    %121 = arith.mulf %119, %120 : vector<8x512xf32>
    %122 = arith.addf %106, %121 : vector<8x512xf32>
    %c56 = arith.constant 56 : index
    %c0_57 = arith.constant 0 : index
    %123 = vector.load %arg2[%c56, %c0_57] : memref<200x2xf32, #tpu.memory_space<vmem>>, vector<8x1xf32>
    %c56_58 = arith.constant 56 : index
    %c1_59 = arith.constant 1 : index
    %124 = vector.load %arg2[%c56_58, %c1_59] : memref<200x2xf32, #tpu.memory_space<vmem>>, vector<8x1xf32>
    %c56_60 = arith.constant 56 : index
    %c0_61 = arith.constant 0 : index
    %125 = vector.load %arg3[%c56_60, %c0_61] : memref<200x1xf32, #tpu.memory_space<vmem>>, vector<8x1xf32>
    %c56_62 = arith.constant 56 : index
    %c0_63 = arith.constant 0 : index
    %126 = vector.load %arg4[%c56_62, %c0_63] : memref<200x1xf32, #tpu.memory_space<vmem>>, vector<8x1xf32>
    %127 = vector.broadcast %123 : vector<8x1xf32> to vector<8x512xf32>
    %128 = arith.mulf %127, %7 : vector<8x512xf32>
    %129 = vector.broadcast %124 : vector<8x1xf32> to vector<8x512xf32>
    %130 = arith.mulf %129, %11 : vector<8x512xf32>
    %131 = arith.addf %128, %130 : vector<8x512xf32>
    %132 = vector.broadcast %125 : vector<8x1xf32> to vector<8x512xf32>
    %133 = arith.addf %131, %132 : vector<8x512xf32>
    %cst_64 = arith.constant 0.000000e+00 : f32
    %134 = vector.broadcast %cst_64 : f32 to vector<8x512xf32>
    %135 = arith.maximumf %133, %134 : vector<8x512xf32>
    %136 = vector.broadcast %126 : vector<8x1xf32> to vector<8x512xf32>
    %137 = arith.mulf %135, %136 : vector<8x512xf32>
    %138 = arith.addf %122, %137 : vector<8x512xf32>
    %c64 = arith.constant 64 : index
    %c0_65 = arith.constant 0 : index
    %139 = vector.load %arg2[%c64, %c0_65] : memref<200x2xf32, #tpu.memory_space<vmem>>, vector<8x1xf32>
    %c64_66 = arith.constant 64 : index
    %c1_67 = arith.constant 1 : index
    %140 = vector.load %arg2[%c64_66, %c1_67] : memref<200x2xf32, #tpu.memory_space<vmem>>, vector<8x1xf32>
    %c64_68 = arith.constant 64 : index
    %c0_69 = arith.constant 0 : index
    %141 = vector.load %arg3[%c64_68, %c0_69] : memref<200x1xf32, #tpu.memory_space<vmem>>, vector<8x1xf32>
    %c64_70 = arith.constant 64 : index
    %c0_71 = arith.constant 0 : index
    %142 = vector.load %arg4[%c64_70, %c0_71] : memref<200x1xf32, #tpu.memory_space<vmem>>, vector<8x1xf32>
    %143 = vector.broadcast %139 : vector<8x1xf32> to vector<8x512xf32>
    %144 = arith.mulf %143, %7 : vector<8x512xf32>
    %145 = vector.broadcast %140 : vector<8x1xf32> to vector<8x512xf32>
    %146 = arith.mulf %145, %11 : vector<8x512xf32>
    %147 = arith.addf %144, %146 : vector<8x512xf32>
    %148 = vector.broadcast %141 : vector<8x1xf32> to vector<8x512xf32>
    %149 = arith.addf %147, %148 : vector<8x512xf32>
    %cst_72 = arith.constant 0.000000e+00 : f32
    %150 = vector.broadcast %cst_72 : f32 to vector<8x512xf32>
    %151 = arith.maximumf %149, %150 : vector<8x512xf32>
    %152 = vector.broadcast %142 : vector<8x1xf32> to vector<8x512xf32>
    %153 = arith.mulf %151, %152 : vector<8x512xf32>
    %154 = arith.addf %138, %153 : vector<8x512xf32>
    %c72 = arith.constant 72 : index
    %c0_73 = arith.constant 0 : index
    %155 = vector.load %arg2[%c72, %c0_73] : memref<200x2xf32, #tpu.memory_space<vmem>>, vector<8x1xf32>
    %c72_74 = arith.constant 72 : index
    %c1_75 = arith.constant 1 : index
    %156 = vector.load %arg2[%c72_74, %c1_75] : memref<200x2xf32, #tpu.memory_space<vmem>>, vector<8x1xf32>
    %c72_76 = arith.constant 72 : index
    %c0_77 = arith.constant 0 : index
    %157 = vector.load %arg3[%c72_76, %c0_77] : memref<200x1xf32, #tpu.memory_space<vmem>>, vector<8x1xf32>
    %c72_78 = arith.constant 72 : index
    %c0_79 = arith.constant 0 : index
    %158 = vector.load %arg4[%c72_78, %c0_79] : memref<200x1xf32, #tpu.memory_space<vmem>>, vector<8x1xf32>
    %159 = vector.broadcast %155 : vector<8x1xf32> to vector<8x512xf32>
    %160 = arith.mulf %159, %7 : vector<8x512xf32>
    %161 = vector.broadcast %156 : vector<8x1xf32> to vector<8x512xf32>
    %162 = arith.mulf %161, %11 : vector<8x512xf32>
    %163 = arith.addf %160, %162 : vector<8x512xf32>
    %164 = vector.broadcast %157 : vector<8x1xf32> to vector<8x512xf32>
    %165 = arith.addf %163, %164 : vector<8x512xf32>
    %cst_80 = arith.constant 0.000000e+00 : f32
    %166 = vector.broadcast %cst_80 : f32 to vector<8x512xf32>
    %167 = arith.maximumf %165, %166 : vector<8x512xf32>
    %168 = vector.broadcast %158 : vector<8x1xf32> to vector<8x512xf32>
    %169 = arith.mulf %167, %168 : vector<8x512xf32>
    %170 = arith.addf %154, %169 : vector<8x512xf32>
    %c80 = arith.constant 80 : index
    %c0_81 = arith.constant 0 : index
    %171 = vector.load %arg2[%c80, %c0_81] : memref<200x2xf32, #tpu.memory_space<vmem>>, vector<8x1xf32>
    %c80_82 = arith.constant 80 : index
    %c1_83 = arith.constant 1 : index
    %172 = vector.load %arg2[%c80_82, %c1_83] : memref<200x2xf32, #tpu.memory_space<vmem>>, vector<8x1xf32>
    %c80_84 = arith.constant 80 : index
    %c0_85 = arith.constant 0 : index
    %173 = vector.load %arg3[%c80_84, %c0_85] : memref<200x1xf32, #tpu.memory_space<vmem>>, vector<8x1xf32>
    %c80_86 = arith.constant 80 : index
    %c0_87 = arith.constant 0 : index
    %174 = vector.load %arg4[%c80_86, %c0_87] : memref<200x1xf32, #tpu.memory_space<vmem>>, vector<8x1xf32>
    %175 = vector.broadcast %171 : vector<8x1xf32> to vector<8x512xf32>
    %176 = arith.mulf %175, %7 : vector<8x512xf32>
    %177 = vector.broadcast %172 : vector<8x1xf32> to vector<8x512xf32>
    %178 = arith.mulf %177, %11 : vector<8x512xf32>
    %179 = arith.addf %176, %178 : vector<8x512xf32>
    %180 = vector.broadcast %173 : vector<8x1xf32> to vector<8x512xf32>
    %181 = arith.addf %179, %180 : vector<8x512xf32>
    %cst_88 = arith.constant 0.000000e+00 : f32
    %182 = vector.broadcast %cst_88 : f32 to vector<8x512xf32>
    %183 = arith.maximumf %181, %182 : vector<8x512xf32>
    %184 = vector.broadcast %174 : vector<8x1xf32> to vector<8x512xf32>
    %185 = arith.mulf %183, %184 : vector<8x512xf32>
    %186 = arith.addf %170, %185 : vector<8x512xf32>
    %c88 = arith.constant 88 : index
    %c0_89 = arith.constant 0 : index
    %187 = vector.load %arg2[%c88, %c0_89] : memref<200x2xf32, #tpu.memory_space<vmem>>, vector<8x1xf32>
    %c88_90 = arith.constant 88 : index
    %c1_91 = arith.constant 1 : index
    %188 = vector.load %arg2[%c88_90, %c1_91] : memref<200x2xf32, #tpu.memory_space<vmem>>, vector<8x1xf32>
    %c88_92 = arith.constant 88 : index
    %c0_93 = arith.constant 0 : index
    %189 = vector.load %arg3[%c88_92, %c0_93] : memref<200x1xf32, #tpu.memory_space<vmem>>, vector<8x1xf32>
    %c88_94 = arith.constant 88 : index
    %c0_95 = arith.constant 0 : index
    %190 = vector.load %arg4[%c88_94, %c0_95] : memref<200x1xf32, #tpu.memory_space<vmem>>, vector<8x1xf32>
    %191 = vector.broadcast %187 : vector<8x1xf32> to vector<8x512xf32>
    %192 = arith.mulf %191, %7 : vector<8x512xf32>
    %193 = vector.broadcast %188 : vector<8x1xf32> to vector<8x512xf32>
    %194 = arith.mulf %193, %11 : vector<8x512xf32>
    %195 = arith.addf %192, %194 : vector<8x512xf32>
    %196 = vector.broadcast %189 : vector<8x1xf32> to vector<8x512xf32>
    %197 = arith.addf %195, %196 : vector<8x512xf32>
    %cst_96 = arith.constant 0.000000e+00 : f32
    %198 = vector.broadcast %cst_96 : f32 to vector<8x512xf32>
    %199 = arith.maximumf %197, %198 : vector<8x512xf32>
    %200 = vector.broadcast %190 : vector<8x1xf32> to vector<8x512xf32>
    %201 = arith.mulf %199, %200 : vector<8x512xf32>
    %202 = arith.addf %186, %201 : vector<8x512xf32>
    %c96 = arith.constant 96 : index
    %c0_97 = arith.constant 0 : index
    %203 = vector.load %arg2[%c96, %c0_97] : memref<200x2xf32, #tpu.memory_space<vmem>>, vector<8x1xf32>
    %c96_98 = arith.constant 96 : index
    %c1_99 = arith.constant 1 : index
    %204 = vector.load %arg2[%c96_98, %c1_99] : memref<200x2xf32, #tpu.memory_space<vmem>>, vector<8x1xf32>
    %c96_100 = arith.constant 96 : index
    %c0_101 = arith.constant 0 : index
    %205 = vector.load %arg3[%c96_100, %c0_101] : memref<200x1xf32, #tpu.memory_space<vmem>>, vector<8x1xf32>
    %c96_102 = arith.constant 96 : index
    %c0_103 = arith.constant 0 : index
    %206 = vector.load %arg4[%c96_102, %c0_103] : memref<200x1xf32, #tpu.memory_space<vmem>>, vector<8x1xf32>
    %207 = vector.broadcast %203 : vector<8x1xf32> to vector<8x512xf32>
    %208 = arith.mulf %207, %7 : vector<8x512xf32>
    %209 = vector.broadcast %204 : vector<8x1xf32> to vector<8x512xf32>
    %210 = arith.mulf %209, %11 : vector<8x512xf32>
    %211 = arith.addf %208, %210 : vector<8x512xf32>
    %212 = vector.broadcast %205 : vector<8x1xf32> to vector<8x512xf32>
    %213 = arith.addf %211, %212 : vector<8x512xf32>
    %cst_104 = arith.constant 0.000000e+00 : f32
    %214 = vector.broadcast %cst_104 : f32 to vector<8x512xf32>
    %215 = arith.maximumf %213, %214 : vector<8x512xf32>
    %216 = vector.broadcast %206 : vector<8x1xf32> to vector<8x512xf32>
    %217 = arith.mulf %215, %216 : vector<8x512xf32>
    %218 = arith.addf %202, %217 : vector<8x512xf32>
    %c104 = arith.constant 104 : index
    %c0_105 = arith.constant 0 : index
    %219 = vector.load %arg2[%c104, %c0_105] : memref<200x2xf32, #tpu.memory_space<vmem>>, vector<8x1xf32>
    %c104_106 = arith.constant 104 : index
    %c1_107 = arith.constant 1 : index
    %220 = vector.load %arg2[%c104_106, %c1_107] : memref<200x2xf32, #tpu.memory_space<vmem>>, vector<8x1xf32>
    %c104_108 = arith.constant 104 : index
    %c0_109 = arith.constant 0 : index
    %221 = vector.load %arg3[%c104_108, %c0_109] : memref<200x1xf32, #tpu.memory_space<vmem>>, vector<8x1xf32>
    %c104_110 = arith.constant 104 : index
    %c0_111 = arith.constant 0 : index
    %222 = vector.load %arg4[%c104_110, %c0_111] : memref<200x1xf32, #tpu.memory_space<vmem>>, vector<8x1xf32>
    %223 = vector.broadcast %219 : vector<8x1xf32> to vector<8x512xf32>
    %224 = arith.mulf %223, %7 : vector<8x512xf32>
    %225 = vector.broadcast %220 : vector<8x1xf32> to vector<8x512xf32>
    %226 = arith.mulf %225, %11 : vector<8x512xf32>
    %227 = arith.addf %224, %226 : vector<8x512xf32>
    %228 = vector.broadcast %221 : vector<8x1xf32> to vector<8x512xf32>
    %229 = arith.addf %227, %228 : vector<8x512xf32>
    %cst_112 = arith.constant 0.000000e+00 : f32
    %230 = vector.broadcast %cst_112 : f32 to vector<8x512xf32>
    %231 = arith.maximumf %229, %230 : vector<8x512xf32>
    %232 = vector.broadcast %222 : vector<8x1xf32> to vector<8x512xf32>
    %233 = arith.mulf %231, %232 : vector<8x512xf32>
    %234 = arith.addf %218, %233 : vector<8x512xf32>
    %c112 = arith.constant 112 : index
    %c0_113 = arith.constant 0 : index
    %235 = vector.load %arg2[%c112, %c0_113] : memref<200x2xf32, #tpu.memory_space<vmem>>, vector<8x1xf32>
    %c112_114 = arith.constant 112 : index
    %c1_115 = arith.constant 1 : index
    %236 = vector.load %arg2[%c112_114, %c1_115] : memref<200x2xf32, #tpu.memory_space<vmem>>, vector<8x1xf32>
    %c112_116 = arith.constant 112 : index
    %c0_117 = arith.constant 0 : index
    %237 = vector.load %arg3[%c112_116, %c0_117] : memref<200x1xf32, #tpu.memory_space<vmem>>, vector<8x1xf32>
    %c112_118 = arith.constant 112 : index
    %c0_119 = arith.constant 0 : index
    %238 = vector.load %arg4[%c112_118, %c0_119] : memref<200x1xf32, #tpu.memory_space<vmem>>, vector<8x1xf32>
    %239 = vector.broadcast %235 : vector<8x1xf32> to vector<8x512xf32>
    %240 = arith.mulf %239, %7 : vector<8x512xf32>
    %241 = vector.broadcast %236 : vector<8x1xf32> to vector<8x512xf32>
    %242 = arith.mulf %241, %11 : vector<8x512xf32>
    %243 = arith.addf %240, %242 : vector<8x512xf32>
    %244 = vector.broadcast %237 : vector<8x1xf32> to vector<8x512xf32>
    %245 = arith.addf %243, %244 : vector<8x512xf32>
    %cst_120 = arith.constant 0.000000e+00 : f32
    %246 = vector.broadcast %cst_120 : f32 to vector<8x512xf32>
    %247 = arith.maximumf %245, %246 : vector<8x512xf32>
    %248 = vector.broadcast %238 : vector<8x1xf32> to vector<8x512xf32>
    %249 = arith.mulf %247, %248 : vector<8x512xf32>
    %250 = arith.addf %234, %249 : vector<8x512xf32>
    %c120 = arith.constant 120 : index
    %c0_121 = arith.constant 0 : index
    %251 = vector.load %arg2[%c120, %c0_121] : memref<200x2xf32, #tpu.memory_space<vmem>>, vector<8x1xf32>
    %c120_122 = arith.constant 120 : index
    %c1_123 = arith.constant 1 : index
    %252 = vector.load %arg2[%c120_122, %c1_123] : memref<200x2xf32, #tpu.memory_space<vmem>>, vector<8x1xf32>
    %c120_124 = arith.constant 120 : index
    %c0_125 = arith.constant 0 : index
    %253 = vector.load %arg3[%c120_124, %c0_125] : memref<200x1xf32, #tpu.memory_space<vmem>>, vector<8x1xf32>
    %c120_126 = arith.constant 120 : index
    %c0_127 = arith.constant 0 : index
    %254 = vector.load %arg4[%c120_126, %c0_127] : memref<200x1xf32, #tpu.memory_space<vmem>>, vector<8x1xf32>
    %255 = vector.broadcast %251 : vector<8x1xf32> to vector<8x512xf32>
    %256 = arith.mulf %255, %7 : vector<8x512xf32>
    %257 = vector.broadcast %252 : vector<8x1xf32> to vector<8x512xf32>
    %258 = arith.mulf %257, %11 : vector<8x512xf32>
    %259 = arith.addf %256, %258 : vector<8x512xf32>
    %260 = vector.broadcast %253 : vector<8x1xf32> to vector<8x512xf32>
    %261 = arith.addf %259, %260 : vector<8x512xf32>
    %cst_128 = arith.constant 0.000000e+00 : f32
    %262 = vector.broadcast %cst_128 : f32 to vector<8x512xf32>
    %263 = arith.maximumf %261, %262 : vector<8x512xf32>
    %264 = vector.broadcast %254 : vector<8x1xf32> to vector<8x512xf32>
    %265 = arith.mulf %263, %264 : vector<8x512xf32>
    %266 = arith.addf %250, %265 : vector<8x512xf32>
    %c128 = arith.constant 128 : index
    %c0_129 = arith.constant 0 : index
    %267 = vector.load %arg2[%c128, %c0_129] : memref<200x2xf32, #tpu.memory_space<vmem>>, vector<8x1xf32>
    %c128_130 = arith.constant 128 : index
    %c1_131 = arith.constant 1 : index
    %268 = vector.load %arg2[%c128_130, %c1_131] : memref<200x2xf32, #tpu.memory_space<vmem>>, vector<8x1xf32>
    %c128_132 = arith.constant 128 : index
    %c0_133 = arith.constant 0 : index
    %269 = vector.load %arg3[%c128_132, %c0_133] : memref<200x1xf32, #tpu.memory_space<vmem>>, vector<8x1xf32>
    %c128_134 = arith.constant 128 : index
    %c0_135 = arith.constant 0 : index
    %270 = vector.load %arg4[%c128_134, %c0_135] : memref<200x1xf32, #tpu.memory_space<vmem>>, vector<8x1xf32>
    %271 = vector.broadcast %267 : vector<8x1xf32> to vector<8x512xf32>
    %272 = arith.mulf %271, %7 : vector<8x512xf32>
    %273 = vector.broadcast %268 : vector<8x1xf32> to vector<8x512xf32>
    %274 = arith.mulf %273, %11 : vector<8x512xf32>
    %275 = arith.addf %272, %274 : vector<8x512xf32>
    %276 = vector.broadcast %269 : vector<8x1xf32> to vector<8x512xf32>
    %277 = arith.addf %275, %276 : vector<8x512xf32>
    %cst_136 = arith.constant 0.000000e+00 : f32
    %278 = vector.broadcast %cst_136 : f32 to vector<8x512xf32>
    %279 = arith.maximumf %277, %278 : vector<8x512xf32>
    %280 = vector.broadcast %270 : vector<8x1xf32> to vector<8x512xf32>
    %281 = arith.mulf %279, %280 : vector<8x512xf32>
    %282 = arith.addf %266, %281 : vector<8x512xf32>
    %c136 = arith.constant 136 : index
    %c0_137 = arith.constant 0 : index
    %283 = vector.load %arg2[%c136, %c0_137] : memref<200x2xf32, #tpu.memory_space<vmem>>, vector<8x1xf32>
    %c136_138 = arith.constant 136 : index
    %c1_139 = arith.constant 1 : index
    %284 = vector.load %arg2[%c136_138, %c1_139] : memref<200x2xf32, #tpu.memory_space<vmem>>, vector<8x1xf32>
    %c136_140 = arith.constant 136 : index
    %c0_141 = arith.constant 0 : index
    %285 = vector.load %arg3[%c136_140, %c0_141] : memref<200x1xf32, #tpu.memory_space<vmem>>, vector<8x1xf32>
    %c136_142 = arith.constant 136 : index
    %c0_143 = arith.constant 0 : index
    %286 = vector.load %arg4[%c136_142, %c0_143] : memref<200x1xf32, #tpu.memory_space<vmem>>, vector<8x1xf32>
    %287 = vector.broadcast %283 : vector<8x1xf32> to vector<8x512xf32>
    %288 = arith.mulf %287, %7 : vector<8x512xf32>
    %289 = vector.broadcast %284 : vector<8x1xf32> to vector<8x512xf32>
    %290 = arith.mulf %289, %11 : vector<8x512xf32>
    %291 = arith.addf %288, %290 : vector<8x512xf32>
    %292 = vector.broadcast %285 : vector<8x1xf32> to vector<8x512xf32>
    %293 = arith.addf %291, %292 : vector<8x512xf32>
    %cst_144 = arith.constant 0.000000e+00 : f32
    %294 = vector.broadcast %cst_144 : f32 to vector<8x512xf32>
    %295 = arith.maximumf %293, %294 : vector<8x512xf32>
    %296 = vector.broadcast %286 : vector<8x1xf32> to vector<8x512xf32>
    %297 = arith.mulf %295, %296 : vector<8x512xf32>
    %298 = arith.addf %282, %297 : vector<8x512xf32>
    %c144 = arith.constant 144 : index
    %c0_145 = arith.constant 0 : index
    %299 = vector.load %arg2[%c144, %c0_145] : memref<200x2xf32, #tpu.memory_space<vmem>>, vector<8x1xf32>
    %c144_146 = arith.constant 144 : index
    %c1_147 = arith.constant 1 : index
    %300 = vector.load %arg2[%c144_146, %c1_147] : memref<200x2xf32, #tpu.memory_space<vmem>>, vector<8x1xf32>
    %c144_148 = arith.constant 144 : index
    %c0_149 = arith.constant 0 : index
    %301 = vector.load %arg3[%c144_148, %c0_149] : memref<200x1xf32, #tpu.memory_space<vmem>>, vector<8x1xf32>
    %c144_150 = arith.constant 144 : index
    %c0_151 = arith.constant 0 : index
    %302 = vector.load %arg4[%c144_150, %c0_151] : memref<200x1xf32, #tpu.memory_space<vmem>>, vector<8x1xf32>
    %303 = vector.broadcast %299 : vector<8x1xf32> to vector<8x512xf32>
    %304 = arith.mulf %303, %7 : vector<8x512xf32>
    %305 = vector.broadcast %300 : vector<8x1xf32> to vector<8x512xf32>
    %306 = arith.mulf %305, %11 : vector<8x512xf32>
    %307 = arith.addf %304, %306 : vector<8x512xf32>
    %308 = vector.broadcast %301 : vector<8x1xf32> to vector<8x512xf32>
    %309 = arith.addf %307, %308 : vector<8x512xf32>
    %cst_152 = arith.constant 0.000000e+00 : f32
    %310 = vector.broadcast %cst_152 : f32 to vector<8x512xf32>
    %311 = arith.maximumf %309, %310 : vector<8x512xf32>
    %312 = vector.broadcast %302 : vector<8x1xf32> to vector<8x512xf32>
    %313 = arith.mulf %311, %312 : vector<8x512xf32>
    %314 = arith.addf %298, %313 : vector<8x512xf32>
    %c152 = arith.constant 152 : index
    %c0_153 = arith.constant 0 : index
    %315 = vector.load %arg2[%c152, %c0_153] : memref<200x2xf32, #tpu.memory_space<vmem>>, vector<8x1xf32>
    %c152_154 = arith.constant 152 : index
    %c1_155 = arith.constant 1 : index
    %316 = vector.load %arg2[%c152_154, %c1_155] : memref<200x2xf32, #tpu.memory_space<vmem>>, vector<8x1xf32>
    %c152_156 = arith.constant 152 : index
    %c0_157 = arith.constant 0 : index
    %317 = vector.load %arg3[%c152_156, %c0_157] : memref<200x1xf32, #tpu.memory_space<vmem>>, vector<8x1xf32>
    %c152_158 = arith.constant 152 : index
    %c0_159 = arith.constant 0 : index
    %318 = vector.load %arg4[%c152_158, %c0_159] : memref<200x1xf32, #tpu.memory_space<vmem>>, vector<8x1xf32>
    %319 = vector.broadcast %315 : vector<8x1xf32> to vector<8x512xf32>
    %320 = arith.mulf %319, %7 : vector<8x512xf32>
    %321 = vector.broadcast %316 : vector<8x1xf32> to vector<8x512xf32>
    %322 = arith.mulf %321, %11 : vector<8x512xf32>
    %323 = arith.addf %320, %322 : vector<8x512xf32>
    %324 = vector.broadcast %317 : vector<8x1xf32> to vector<8x512xf32>
    %325 = arith.addf %323, %324 : vector<8x512xf32>
    %cst_160 = arith.constant 0.000000e+00 : f32
    %326 = vector.broadcast %cst_160 : f32 to vector<8x512xf32>
    %327 = arith.maximumf %325, %326 : vector<8x512xf32>
    %328 = vector.broadcast %318 : vector<8x1xf32> to vector<8x512xf32>
    %329 = arith.mulf %327, %328 : vector<8x512xf32>
    %330 = arith.addf %314, %329 : vector<8x512xf32>
    %c160 = arith.constant 160 : index
    %c0_161 = arith.constant 0 : index
    %331 = vector.load %arg2[%c160, %c0_161] : memref<200x2xf32, #tpu.memory_space<vmem>>, vector<8x1xf32>
    %c160_162 = arith.constant 160 : index
    %c1_163 = arith.constant 1 : index
    %332 = vector.load %arg2[%c160_162, %c1_163] : memref<200x2xf32, #tpu.memory_space<vmem>>, vector<8x1xf32>
    %c160_164 = arith.constant 160 : index
    %c0_165 = arith.constant 0 : index
    %333 = vector.load %arg3[%c160_164, %c0_165] : memref<200x1xf32, #tpu.memory_space<vmem>>, vector<8x1xf32>
    %c160_166 = arith.constant 160 : index
    %c0_167 = arith.constant 0 : index
    %334 = vector.load %arg4[%c160_166, %c0_167] : memref<200x1xf32, #tpu.memory_space<vmem>>, vector<8x1xf32>
    %335 = vector.broadcast %331 : vector<8x1xf32> to vector<8x512xf32>
    %336 = arith.mulf %335, %7 : vector<8x512xf32>
    %337 = vector.broadcast %332 : vector<8x1xf32> to vector<8x512xf32>
    %338 = arith.mulf %337, %11 : vector<8x512xf32>
    %339 = arith.addf %336, %338 : vector<8x512xf32>
    %340 = vector.broadcast %333 : vector<8x1xf32> to vector<8x512xf32>
    %341 = arith.addf %339, %340 : vector<8x512xf32>
    %cst_168 = arith.constant 0.000000e+00 : f32
    %342 = vector.broadcast %cst_168 : f32 to vector<8x512xf32>
    %343 = arith.maximumf %341, %342 : vector<8x512xf32>
    %344 = vector.broadcast %334 : vector<8x1xf32> to vector<8x512xf32>
    %345 = arith.mulf %343, %344 : vector<8x512xf32>
    %346 = arith.addf %330, %345 : vector<8x512xf32>
    %c168 = arith.constant 168 : index
    %c0_169 = arith.constant 0 : index
    %347 = vector.load %arg2[%c168, %c0_169] : memref<200x2xf32, #tpu.memory_space<vmem>>, vector<8x1xf32>
    %c168_170 = arith.constant 168 : index
    %c1_171 = arith.constant 1 : index
    %348 = vector.load %arg2[%c168_170, %c1_171] : memref<200x2xf32, #tpu.memory_space<vmem>>, vector<8x1xf32>
    %c168_172 = arith.constant 168 : index
    %c0_173 = arith.constant 0 : index
    %349 = vector.load %arg3[%c168_172, %c0_173] : memref<200x1xf32, #tpu.memory_space<vmem>>, vector<8x1xf32>
    %c168_174 = arith.constant 168 : index
    %c0_175 = arith.constant 0 : index
    %350 = vector.load %arg4[%c168_174, %c0_175] : memref<200x1xf32, #tpu.memory_space<vmem>>, vector<8x1xf32>
    %351 = vector.broadcast %347 : vector<8x1xf32> to vector<8x512xf32>
    %352 = arith.mulf %351, %7 : vector<8x512xf32>
    %353 = vector.broadcast %348 : vector<8x1xf32> to vector<8x512xf32>
    %354 = arith.mulf %353, %11 : vector<8x512xf32>
    %355 = arith.addf %352, %354 : vector<8x512xf32>
    %356 = vector.broadcast %349 : vector<8x1xf32> to vector<8x512xf32>
    %357 = arith.addf %355, %356 : vector<8x512xf32>
    %cst_176 = arith.constant 0.000000e+00 : f32
    %358 = vector.broadcast %cst_176 : f32 to vector<8x512xf32>
    %359 = arith.maximumf %357, %358 : vector<8x512xf32>
    %360 = vector.broadcast %350 : vector<8x1xf32> to vector<8x512xf32>
    %361 = arith.mulf %359, %360 : vector<8x512xf32>
    %362 = arith.addf %346, %361 : vector<8x512xf32>
    %c176 = arith.constant 176 : index
    %c0_177 = arith.constant 0 : index
    %363 = vector.load %arg2[%c176, %c0_177] : memref<200x2xf32, #tpu.memory_space<vmem>>, vector<8x1xf32>
    %c176_178 = arith.constant 176 : index
    %c1_179 = arith.constant 1 : index
    %364 = vector.load %arg2[%c176_178, %c1_179] : memref<200x2xf32, #tpu.memory_space<vmem>>, vector<8x1xf32>
    %c176_180 = arith.constant 176 : index
    %c0_181 = arith.constant 0 : index
    %365 = vector.load %arg3[%c176_180, %c0_181] : memref<200x1xf32, #tpu.memory_space<vmem>>, vector<8x1xf32>
    %c176_182 = arith.constant 176 : index
    %c0_183 = arith.constant 0 : index
    %366 = vector.load %arg4[%c176_182, %c0_183] : memref<200x1xf32, #tpu.memory_space<vmem>>, vector<8x1xf32>
    %367 = vector.broadcast %363 : vector<8x1xf32> to vector<8x512xf32>
    %368 = arith.mulf %367, %7 : vector<8x512xf32>
    %369 = vector.broadcast %364 : vector<8x1xf32> to vector<8x512xf32>
    %370 = arith.mulf %369, %11 : vector<8x512xf32>
    %371 = arith.addf %368, %370 : vector<8x512xf32>
    %372 = vector.broadcast %365 : vector<8x1xf32> to vector<8x512xf32>
    %373 = arith.addf %371, %372 : vector<8x512xf32>
    %cst_184 = arith.constant 0.000000e+00 : f32
    %374 = vector.broadcast %cst_184 : f32 to vector<8x512xf32>
    %375 = arith.maximumf %373, %374 : vector<8x512xf32>
    %376 = vector.broadcast %366 : vector<8x1xf32> to vector<8x512xf32>
    %377 = arith.mulf %375, %376 : vector<8x512xf32>
    %378 = arith.addf %362, %377 : vector<8x512xf32>
    %c184 = arith.constant 184 : index
    %c0_185 = arith.constant 0 : index
    %379 = vector.load %arg2[%c184, %c0_185] : memref<200x2xf32, #tpu.memory_space<vmem>>, vector<8x1xf32>
    %c184_186 = arith.constant 184 : index
    %c1_187 = arith.constant 1 : index
    %380 = vector.load %arg2[%c184_186, %c1_187] : memref<200x2xf32, #tpu.memory_space<vmem>>, vector<8x1xf32>
    %c184_188 = arith.constant 184 : index
    %c0_189 = arith.constant 0 : index
    %381 = vector.load %arg3[%c184_188, %c0_189] : memref<200x1xf32, #tpu.memory_space<vmem>>, vector<8x1xf32>
    %c184_190 = arith.constant 184 : index
    %c0_191 = arith.constant 0 : index
    %382 = vector.load %arg4[%c184_190, %c0_191] : memref<200x1xf32, #tpu.memory_space<vmem>>, vector<8x1xf32>
    %383 = vector.broadcast %379 : vector<8x1xf32> to vector<8x512xf32>
    %384 = arith.mulf %383, %7 : vector<8x512xf32>
    %385 = vector.broadcast %380 : vector<8x1xf32> to vector<8x512xf32>
    %386 = arith.mulf %385, %11 : vector<8x512xf32>
    %387 = arith.addf %384, %386 : vector<8x512xf32>
    %388 = vector.broadcast %381 : vector<8x1xf32> to vector<8x512xf32>
    %389 = arith.addf %387, %388 : vector<8x512xf32>
    %cst_192 = arith.constant 0.000000e+00 : f32
    %390 = vector.broadcast %cst_192 : f32 to vector<8x512xf32>
    %391 = arith.maximumf %389, %390 : vector<8x512xf32>
    %392 = vector.broadcast %382 : vector<8x1xf32> to vector<8x512xf32>
    %393 = arith.mulf %391, %392 : vector<8x512xf32>
    %394 = arith.addf %378, %393 : vector<8x512xf32>
    %c192 = arith.constant 192 : index
    %c0_193 = arith.constant 0 : index
    %395 = vector.load %arg2[%c192, %c0_193] : memref<200x2xf32, #tpu.memory_space<vmem>>, vector<8x1xf32>
    %c192_194 = arith.constant 192 : index
    %c1_195 = arith.constant 1 : index
    %396 = vector.load %arg2[%c192_194, %c1_195] : memref<200x2xf32, #tpu.memory_space<vmem>>, vector<8x1xf32>
    %c192_196 = arith.constant 192 : index
    %c0_197 = arith.constant 0 : index
    %397 = vector.load %arg3[%c192_196, %c0_197] : memref<200x1xf32, #tpu.memory_space<vmem>>, vector<8x1xf32>
    %c192_198 = arith.constant 192 : index
    %c0_199 = arith.constant 0 : index
    %398 = vector.load %arg4[%c192_198, %c0_199] : memref<200x1xf32, #tpu.memory_space<vmem>>, vector<8x1xf32>
    %399 = vector.broadcast %395 : vector<8x1xf32> to vector<8x512xf32>
    %400 = arith.mulf %399, %7 : vector<8x512xf32>
    %401 = vector.broadcast %396 : vector<8x1xf32> to vector<8x512xf32>
    %402 = arith.mulf %401, %11 : vector<8x512xf32>
    %403 = arith.addf %400, %402 : vector<8x512xf32>
    %404 = vector.broadcast %397 : vector<8x1xf32> to vector<8x512xf32>
    %405 = arith.addf %403, %404 : vector<8x512xf32>
    %cst_200 = arith.constant 0.000000e+00 : f32
    %406 = vector.broadcast %cst_200 : f32 to vector<8x512xf32>
    %407 = arith.maximumf %405, %406 : vector<8x512xf32>
    %408 = vector.broadcast %398 : vector<8x1xf32> to vector<8x512xf32>
    %409 = arith.mulf %407, %408 : vector<8x512xf32>
    %410 = arith.addf %394, %409 : vector<8x512xf32>
    %cst_201 = arith.constant dense<0.000000e+00> : vector<512xf32>
    %411 = vector.multi_reduction <add>, %410, %cst_201 [0] : vector<8x512xf32> to vector<512xf32>
    %412 = vector.shape_cast %411 : vector<512xf32> to vector<1x512xf32>
    %c0_202 = arith.constant 0 : index
    %c0_203 = arith.constant 0 : index
    %413 = vector.load %arg5[%c0_202, %c0_203] : memref<1x1xf32, #tpu.memory_space<vmem>>, vector<1x1xf32>
    %414 = vector.broadcast %413 : vector<1x1xf32> to vector<1x512xf32>
    %415 = arith.addf %412, %414 : vector<1x512xf32>
    %c0_204 = arith.constant 0 : index
    %416 = arith.index_cast %3 : i32 to index
    %417 = vector.load %arg6[%c0_204, %416] : memref<1x512xf32, #tpu.memory_space<vmem>>, vector<1x512xf32>
    tpu.vector_store %arg6[%c0_204, %416], %415 {strides = array<i32>} : memref<1x512xf32, #tpu.memory_space<vmem>>, vector<1x512xf32>,
    %c1_i32_205 = arith.constant 1 : i32
    return
  }
  func.func @transform_0(%arg0: i32) -> (i32, i32) {
    %c0_i32 = arith.constant 0 : i32
    %c0_i32_0 = arith.constant 0 : i32
    return %c0_i32, %arg0 : i32, i32
  }
  func.func @transform_1(%arg0: i32) -> (i32, i32) {
    %c0_i32 = arith.constant 0 : i32
    %c0_i32_0 = arith.constant 0 : i32
    %c0_i32_1 = arith.constant 0 : i32
    return %c0_i32, %c0_i32_0 : i32, i32
  }
  func.func @transform_2(%arg0: i32) -> (i32, i32) {
    %c0_i32 = arith.constant 0 : i32
    %c0_i32_0 = arith.constant 0 : i32
    %c0_i32_1 = arith.constant 0 : i32
    return %c0_i32, %c0_i32_0 : i32, i32
  }
  func.func @transform_3(%arg0: i32) -> (i32, i32) {
    %c0_i32 = arith.constant 0 : i32
    %c0_i32_0 = arith.constant 0 : i32
    %c0_i32_1 = arith.constant 0 : i32
    return %c0_i32, %c0_i32_0 : i32, i32
  }
  func.func @transform_4(%arg0: i32) -> (i32, i32) {
    %c0_i32 = arith.constant 0 : i32
    %c0_i32_0 = arith.constant 0 : i32
    %c0_i32_1 = arith.constant 0 : i32
    return %c0_i32, %c0_i32_0 : i32, i32
  }
  func.func @transform_5(%arg0: i32) -> (i32, i32) {
    %c0_i32 = arith.constant 0 : i32
    %c0_i32_0 = arith.constant 0 : i32
    return %c0_i32, %arg0 : i32, i32
  }
}

</mosaic_0001>

<llo_original>
// kernel: network_forward.1
$region0: #{network_forward.1}
  #allocation0 [shape = 'u32[]', space=smem, size = 0x4, offset = 0x4, fixed_abs, tag = 'smem constant byte address 0x4 - core index']
  #allocation1 [shape = 'u32[72,128]{1,0:T(1,128)}', space=vmem, size = 0x9000, scoped, tag = 'internal scratch']
  #allocation2 [shape = 'f32[1,1]{1,0:T(1,128)S(1)}', space=vmem, size = 0x200, scoped, tag = 'scoped memory for network_forward.1']
  %s0 = inlined_call_operand.vmem [shape: f32[2,512], index: 0, kind: input, shape index: {}]
  %s1 = inlined_call_operand.vmem [shape: f32[200,2], index: 1, kind: input, shape index: {}]
  %s2 = inlined_call_operand.vmem [shape: f32[200,1], index: 2, kind: input, shape index: {}]
  %s3 = inlined_call_operand.vmem [shape: f32[200,1], index: 3, kind: input, shape index: {}]
  %s4 = inlined_call_operand.<no memory space> [shape: f32[1,1], index: 4, kind: input, shape index: {}]
  %s5 = inlined_call_operand.vmem [shape: f32[1,512], index: 5, kind: output, shape index: {}]
  %s6 = sld [smem:[#allocation0]]
  $region30: #{network_forward.1} parent=0
    _
  %s8 = ssub.s32 1, %s6
  %s9 = scalar_select 0, %s8, %s6
  %v10 = vstv %s4
  %11 = vst [vmem:[#allocation2] sm:$0x1] %v10
  // Predicated region
  $region2: #{network_forward.1} parent=0 // pred_check
    _
  $region3: #{network_forward.1} parent=0 // pred_check_branch
    %13 = sbr.rel (0) target = $region5
  $region4: #{network_forward.1} parent=0 // pred_region
    _
  $region5: #{network_forward.1} parent=0 // pred_fallthru
    _
  // Predicated region
  $region6: #{network_forward.1} parent=0 // pred_check
    _
  $region7: #{network_forward.1} parent=0 // pred_check_branch
    %15 = sbr.rel (0) target = $region9
  $region8: #{network_forward.1} parent=0 // pred_region
    _
  $region9: #{network_forward.1} parent=0 // pred_fallthru
    _
  // Predicated region
  $region10: #{network_forward.1} parent=0 // pred_check
    _
  $region11: #{network_forward.1} parent=0 // pred_check_branch
    %17 = sbr.rel (0) target = $region13
  $region12: #{network_forward.1} parent=0 // pred_region
    _
  $region13: #{network_forward.1} parent=0 // pred_fallthru
    _
  // Predicated region
  $region14: #{network_forward.1} parent=0 // pred_check
    _
  $region15: #{network_forward.1} parent=0 // pred_check_branch
    %19 = sbr.rel (0) target = $region17
  $region16: #{network_forward.1} parent=0 // pred_region
    _
  $region17: #{network_forward.1} parent=0 // pred_fallthru
    _
  // Predicated region
  $region18: #{network_forward.1} parent=0 // pred_check
    _
  $region19: #{network_forward.1} parent=0 // pred_check_branch
    %21 = sbr.rel (0) target = $region21
  $region20: #{network_forward.1} parent=0 // pred_region
    _
  $region21: #{network_forward.1} parent=0 // pred_fallthru
    _
  %v22 = vld [vmem:[%s0] ss:$2 sm:$0xf]
  %v24 = vperm.slane %v22, 0
  %v25 = vperm.slane %v22, 1
  %v26 = vperm.slane %v22, 2
  %v27 = vperm.slane %v22, 3
  %s32 = scalar_lea.vmem %s0, 1
  %v33 = vld [vmem:[%s32] ss:$2 sm:$0xf]
  %v35 = vperm.slane %v33, 0
  %v36 = vperm.slane %v33, 1
  %v37 = vperm.slane %v33, 2
  %v38 = vperm.slane %v33, 3
  %v43 = vld [vmem:[%s1] sm:$0xff]
  %v44 = vld [vmem:[%s2] sm:$0xff]
  %v45 = vld [vmem:[%s3] sm:$0xff]
  %47 = vset.pattern.permute.xlu0 0
  %48 = vperm.xlu0 %47, %v43
  %v49 = vpop.permute.xlu0 %48
  %v51 = vmul.f32 %v49, %v24
  %v52 = vmul.f32 %v49, %v25
  %v53 = vmul.f32 %v49, %v26
  %v54 = vmul.f32 %v49, %v27
  %55 = vset.pattern.permute.xlu0 1
  %56 = vperm.xlu0 %55, %v43
  %v57 = vpop.permute.xlu0 %56
  %v59 = vmul.f32 %v57, %v35
  %v60 = vmul.f32 %v57, %v36
  %v61 = vmul.f32 %v57, %v37
  %v62 = vmul.f32 %v57, %v38
  %v63 = vadd.f32 %v51, %v59
  %v64 = vadd.f32 %v52, %v60
  %v65 = vadd.f32 %v53, %v61
  %v66 = vadd.f32 %v54, %v62
  %68 = vset.pattern.permute.xlu0 0
  %69 = vperm.xlu0 %68, %v44
  %v70 = vpop.permute.xlu0 %69
  %v72 = vadd.f32 %v63, %v70
  %v73 = vadd.f32 %v64, %v70
  %v74 = vadd.f32 %v65, %v70
  %v75 = vadd.f32 %v66, %v70
  %v76 = vmax.f32 %v72, 0.0
  %v77 = vmax.f32 %v73, 0.0
  %v78 = vmax.f32 %v74, 0.0
  %v79 = vmax.f32 %v75, 0.0
  %81 = vset.pattern.permute.xlu0 0
  %82 = vperm.xlu0 %81, %v45
  %v83 = vpop.permute.xlu0 %82
  %v85 = vmul.f32 %v76, %v83
  %v86 = vmul.f32 %v77, %v83
  %v87 = vmul.f32 %v78, %v83
  %v88 = vmul.f32 %v79, %v83
  %v89 = vld [vmem:[%s1 + $0x8] sm:$0xff]
  %v90 = vld [vmem:[%s2 + $0x8] sm:$0xff]
  %v91 = vld [vmem:[%s3 + $0x8] sm:$0xff]
  %93 = vset.pattern.permute.xlu0 0
  %94 = vperm.xlu0 %93, %v89
  %v95 = vpop.permute.xlu0 %94
  %v97 = vmul.f32 %v95, %v24
  %v98 = vmul.f32 %v95, %v25
  %v99 = vmul.f32 %v95, %v26
  %v100 = vmul.f32 %v95, %v27
  %101 = vset.pattern.permute.xlu0 1
  %102 = vperm.xlu0 %101, %v89
  %v103 = vpop.permute.xlu0 %102
  %v105 = vmul.f32 %v103, %v35
  %v106 = vmul.f32 %v103, %v36
  %v107 = vmul.f32 %v103, %v37
  %v108 = vmul.f32 %v103, %v38
  %v109 = vadd.f32 %v97, %v105
  %v110 = vadd.f32 %v98, %v106
  %v111 = vadd.f32 %v99, %v107
  %v112 = vadd.f32 %v100, %v108
  %114 = vset.pattern.permute.xlu0 0
  %115 = vperm.xlu0 %114, %v90
  %v116 = vpop.permute.xlu0 %115
  %v118 = vadd.f32 %v109, %v116
  %v119 = vadd.f32 %v110, %v116
  %v120 = vadd.f32 %v111, %v116
  %v121 = vadd.f32 %v112, %v116
  %v122 = vmax.f32 %v118, 0.0
  %v123 = vmax.f32 %v119, 0.0
  %v124 = vmax.f32 %v120, 0.0
  %v125 = vmax.f32 %v121, 0.0
  %127 = vset.pattern.permute.xlu0 0
  %128 = vperm.xlu0 %127, %v91
  %v129 = vpop.permute.xlu0 %128
  %v131 = vmul.f32 %v122, %v129
  %v132 = vmul.f32 %v123, %v129
  %v133 = vmul.f32 %v124, %v129
  %v134 = vmul.f32 %v125, %v129
  %v135 = vadd.f32 %v85, %v131
  %v136 = vadd.f32 %v86, %v132
  %v137 = vadd.f32 %v87, %v133
  %v138 = vadd.f32 %v88, %v134
  %v139 = vld [vmem:[%s1 + $0x10] sm:$0xff]
  %v140 = vld [vmem:[%s2 + $0x10] sm:$0xff]
  %v141 = vld [vmem:[%s3 + $0x10] sm:$0xff]
  %143 = vset.pattern.permute.xlu0 0
  %144 = vperm.xlu0 %143, %v139
  %v145 = vpop.permute.xlu0 %144
  %v147 = vmul.f32 %v145, %v24
  %v148 = vmul.f32 %v145, %v25
  %v149 = vmul.f32 %v145, %v26
  %v150 = vmul.f32 %v145, %v27
  %151 = vset.pattern.permute.xlu0 1
  %152 = vperm.xlu0 %151, %v139
  %v153 = vpop.permute.xlu0 %152
  %v155 = vmul.f32 %v153, %v35
  %v156 = vmul.f32 %v153, %v36
  %v157 = vmul.f32 %v153, %v37
  %v158 = vmul.f32 %v153, %v38
  %v159 = vadd.f32 %v147, %v155
  %v160 = vadd.f32 %v148, %v156
  %v161 = vadd.f32 %v149, %v157
  %v162 = vadd.f32 %v150, %v158
  %164 = vset.pattern.permute.xlu0 0
  %165 = vperm.xlu0 %164, %v140
  %v166 = vpop.permute.xlu0 %165
  %v168 = vadd.f32 %v159, %v166
  %v169 = vadd.f32 %v160, %v166
  %v170 = vadd.f32 %v161, %v166
  %v171 = vadd.f32 %v162, %v166
  %v172 = vmax.f32 %v168, 0.0
  %v173 = vmax.f32 %v169, 0.0
  %v174 = vmax.f32 %v170, 0.0
  %v175 = vmax.f32 %v171, 0.0
  %177 = vset.pattern.permute.xlu0 0
  %178 = vperm.xlu0 %177, %v141
  %v179 = vpop.permute.xlu0 %178
  %v181 = vmul.f32 %v172, %v179
  %v182 = vmul.f32 %v173, %v179
  %v183 = vmul.f32 %v174, %v179
  %v184 = vmul.f32 %v175, %v179
  %v185 = vadd.f32 %v135, %v181
  %v186 = vadd.f32 %v136, %v182
  %v187 = vadd.f32 %v137, %v183
  %v188 = vadd.f32 %v138, %v184
  %v189 = vld [vmem:[%s1 + $0x18] sm:$0xff]
  %v190 = vld [vmem:[%s2 + $0x18] sm:$0xff]
  %v191 = vld [vmem:[%s3 + $0x18] sm:$0xff]
  %193 = vset.pattern.permute.xlu0 0
  %194 = vperm.xlu0 %193, %v189
  %v195 = vpop.permute.xlu0 %194
  %v197 = vmul.f32 %v195, %v24
  %v198 = vmul.f32 %v195, %v25
  %v199 = vmul.f32 %v195, %v26
  %v200 = vmul.f32 %v195, %v27
  %201 = vset.pattern.permute.xlu0 1
  %202 = vperm.xlu0 %201, %v189
  %v203 = vpop.permute.xlu0 %202
  %v205 = vmul.f32 %v203, %v35
  %v206 = vmul.f32 %v203, %v36
  %v207 = vmul.f32 %v203, %v37
  %v208 = vmul.f32 %v203, %v38
  %v209 = vadd.f32 %v197, %v205
  %v210 = vadd.f32 %v198, %v206
  %v211 = vadd.f32 %v199, %v207
  %v212 = vadd.f32 %v200, %v208
  %214 = vset.pattern.permute.xlu0 0
  %215 = vperm.xlu0 %214, %v190
  %v216 = vpop.permute.xlu0 %215
  %v218 = vadd.f32 %v209, %v216
  %v219 = vadd.f32 %v210, %v216
  %v220 = vadd.f32 %v211, %v216
  %v221 = vadd.f32 %v212, %v216
  %v222 = vmax.f32 %v218, 0.0
  %v223 = vmax.f32 %v219, 0.0
  %v224 = vmax.f32 %v220, 0.0
  %v225 = vmax.f32 %v221, 0.0
  %227 = vset.pattern.permute.xlu0 0
  %228 = vperm.xlu0 %227, %v191
  %v229 = vpop.permute.xlu0 %228
  %v231 = vmul.f32 %v222, %v229
  %v232 = vmul.f32 %v223, %v229
  %v233 = vmul.f32 %v224, %v229
  %v234 = vmul.f32 %v225, %v229
  %v235 = vadd.f32 %v185, %v231
  %v236 = vadd.f32 %v186, %v232
  %v237 = vadd.f32 %v187, %v233
  %v238 = vadd.f32 %v188, %v234
  %v239 = vld [vmem:[%s1 + $0x20] sm:$0xff]
  %v240 = vld [vmem:[%s2 + $0x20] sm:$0xff]
  %v241 = vld [vmem:[%s3 + $0x20] sm:$0xff]
  %243 = vset.pattern.permute.xlu0 0
  %244 = vperm.xlu0 %243, %v239
  %v245 = vpop.permute.xlu0 %244
  %v247 = vmul.f32 %v245, %v24
  %v248 = vmul.f32 %v245, %v25
  %v249 = vmul.f32 %v245, %v26
  %v250 = vmul.f32 %v245, %v27
  %251 = vset.pattern.permute.xlu0 1
  %252 = vperm.xlu0 %251, %v239
  %v253 = vpop.permute.xlu0 %252
  %v255 = vmul.f32 %v253, %v35
  %v256 = vmul.f32 %v253, %v36
  %v257 = vmul.f32 %v253, %v37
  %v258 = vmul.f32 %v253, %v38
  %v259 = vadd.f32 %v247, %v255
  %v260 = vadd.f32 %v248, %v256
  %v261 = vadd.f32 %v249, %v257
  %v262 = vadd.f32 %v250, %v258
  %264 = vset.pattern.permute.xlu0 0
  %265 = vperm.xlu0 %264, %v240
  %v266 = vpop.permute.xlu0 %265
  %v268 = vadd.f32 %v259, %v266
  %v269 = vadd.f32 %v260, %v266
  %v270 = vadd.f32 %v261, %v266
  %v271 = vadd.f32 %v262, %v266
  %v272 = vmax.f32 %v268, 0.0
  %v273 = vmax.f32 %v269, 0.0
  %v274 = vmax.f32 %v270, 0.0
  %v275 = vmax.f32 %v271, 0.0
  %277 = vset.pattern.permute.xlu0 0
  %278 = vperm.xlu0 %277, %v241
  %v279 = vpop.permute.xlu0 %278
  %v281 = vmul.f32 %v272, %v279
  %v282 = vmul.f32 %v273, %v279
  %v283 = vmul.f32 %v274, %v279
  %v284 = vmul.f32 %v275, %v279
  %v285 = vadd.f32 %v235, %v281
  %v286 = vadd.f32 %v236, %v282
  %v287 = vadd.f32 %v237, %v283
  %v288 = vadd.f32 %v238, %v284
  %v289 = vld [vmem:[%s1 + $0x28] sm:$0xff]
  %v290 = vld [vmem:[%s2 + $0x28] sm:$0xff]
  %v291 = vld [vmem:[%s3 + $0x28] sm:$0xff]
  %293 = vset.pattern.permute.xlu0 0
  %294 = vperm.xlu0 %293, %v289
  %v295 = vpop.permute.xlu0 %294
  %v297 = vmul.f32 %v295, %v24
  %v298 = vmul.f32 %v295, %v25
  %v299 = vmul.f32 %v295, %v26
  %v300 = vmul.f32 %v295, %v27
  %301 = vset.pattern.permute.xlu0 1
  %302 = vperm.xlu0 %301, %v289
  %v303 = vpop.permute.xlu0 %302
  %v305 = vmul.f32 %v303, %v35
  %v306 = vmul.f32 %v303, %v36
  %v307 = vmul.f32 %v303, %v37
  %v308 = vmul.f32 %v303, %v38
  %v309 = vadd.f32 %v297, %v305
  %v310 = vadd.f32 %v298, %v306
  %v311 = vadd.f32 %v299, %v307
  %v312 = vadd.f32 %v300, %v308
  %314 = vset.pattern.permute.xlu0 0
  %315 = vperm.xlu0 %314, %v290
  %v316 = vpop.permute.xlu0 %315
  %v318 = vadd.f32 %v309, %v316
  %v319 = vadd.f32 %v310, %v316
  %v320 = vadd.f32 %v311, %v316
  %v321 = vadd.f32 %v312, %v316
  %v322 = vmax.f32 %v318, 0.0
  %v323 = vmax.f32 %v319, 0.0
  %v324 = vmax.f32 %v320, 0.0
  %v325 = vmax.f32 %v321, 0.0
  %327 = vset.pattern.permute.xlu0 0
  %328 = vperm.xlu0 %327, %v291
  %v329 = vpop.permute.xlu0 %328
  %v331 = vmul.f32 %v322, %v329
  %v332 = vmul.f32 %v323, %v329
  %v333 = vmul.f32 %v324, %v329
  %v334 = vmul.f32 %v325, %v329
  %v335 = vadd.f32 %v285, %v331
  %v336 = vadd.f32 %v286, %v332
  %v337 = vadd.f32 %v287, %v333
  %v338 = vadd.f32 %v288, %v334
  %v339 = vld [vmem:[%s1 + $0x30] sm:$0xff]
  %v340 = vld [vmem:[%s2 + $0x30] sm:$0xff]
  %v341 = vld [vmem:[%s3 + $0x30] sm:$0xff]
  %343 = vset.pattern.permute.xlu0 0
  %344 = vperm.xlu0 %343, %v339
  %v345 = vpop.permute.xlu0 %344
  %v347 = vmul.f32 %v345, %v24
  %v348 = vmul.f32 %v345, %v25
  %v349 = vmul.f32 %v345, %v26
  %v350 = vmul.f32 %v345, %v27
  %351 = vset.pattern.permute.xlu0 1
  %352 = vperm.xlu0 %351, %v339
  %v353 = vpop.permute.xlu0 %352
  %v355 = vmul.f32 %v353, %v35
  %v356 = vmul.f32 %v353, %v36
  %v357 = vmul.f32 %v353, %v37
  %v358 = vmul.f32 %v353, %v38
  %v359 = vadd.f32 %v347, %v355
  %v360 = vadd.f32 %v348, %v356
  %v361 = vadd.f32 %v349, %v357
  %v362 = vadd.f32 %v350, %v358
  %364 = vset.pattern.permute.xlu0 0
  %365 = vperm.xlu0 %364, %v340
  %v366 = vpop.permute.xlu0 %365
  %v368 = vadd.f32 %v359, %v366
  %v369 = vadd.f32 %v360, %v366
  %v370 = vadd.f32 %v361, %v366
  %v371 = vadd.f32 %v362, %v366
  %v372 = vmax.f32 %v368, 0.0
  %v373 = vmax.f32 %v369, 0.0
  %v374 = vmax.f32 %v370, 0.0
  %v375 = vmax.f32 %v371, 0.0
  %377 = vset.pattern.permute.xlu0 0
  %378 = vperm.xlu0 %377, %v341
  %v379 = vpop.permute.xlu0 %378
  %v381 = vmul.f32 %v372, %v379
  %v382 = vmul.f32 %v373, %v379
  %v383 = vmul.f32 %v374, %v379
  %v384 = vmul.f32 %v375, %v379
  %v385 = vadd.f32 %v335, %v381
  %v386 = vadd.f32 %v336, %v382
  %v387 = vadd.f32 %v337, %v383
  %v388 = vadd.f32 %v338, %v384
  %v389 = vld [vmem:[%s1 + $0x38] sm:$0xff]
  %v390 = vld [vmem:[%s2 + $0x38] sm:$0xff]
  %v391 = vld [vmem:[%s3 + $0x38] sm:$0xff]
  %393 = vset.pattern.permute.xlu0 0
  %394 = vperm.xlu0 %393, %v389
  %v395 = vpop.permute.xlu0 %394
  %v397 = vmul.f32 %v395, %v24
  %v398 = vmul.f32 %v395, %v25
  %v399 = vmul.f32 %v395, %v26
  %v400 = vmul.f32 %v395, %v27
  %401 = vset.pattern.permute.xlu0 1
  %402 = vperm.xlu0 %401, %v389
  %v403 = vpop.permute.xlu0 %402
  %v405 = vmul.f32 %v403, %v35
  %v406 = vmul.f32 %v403, %v36
  %v407 = vmul.f32 %v403, %v37
  %v408 = vmul.f32 %v403, %v38
  %v409 = vadd.f32 %v397, %v405
  %v410 = vadd.f32 %v398, %v406
  %v411 = vadd.f32 %v399, %v407
  %v412 = vadd.f32 %v400, %v408
  %414 = vset.pattern.permute.xlu0 0
  %415 = vperm.xlu0 %414, %v390
  %v416 = vpop.permute.xlu0 %415
  %v418 = vadd.f32 %v409, %v416
  %v419 = vadd.f32 %v410, %v416
  %v420 = vadd.f32 %v411, %v416
  %v421 = vadd.f32 %v412, %v416
  %v422 = vmax.f32 %v418, 0.0
  %v423 = vmax.f32 %v419, 0.0
  %v424 = vmax.f32 %v420, 0.0
  %v425 = vmax.f32 %v421, 0.0
  %427 = vset.pattern.permute.xlu0 0
  %428 = vperm.xlu0 %427, %v391
  %v429 = vpop.permute.xlu0 %428
  %v431 = vmul.f32 %v422, %v429
  %v432 = vmul.f32 %v423, %v429
  %v433 = vmul.f32 %v424, %v429
  %v434 = vmul.f32 %v425, %v429
  %v435 = vadd.f32 %v385, %v431
  %v436 = vadd.f32 %v386, %v432
  %v437 = vadd.f32 %v387, %v433
  %v438 = vadd.f32 %v388, %v434
  %v439 = vld [vmem:[%s1 + $0x40] sm:$0xff]
  %v440 = vld [vmem:[%s2 + $0x40] sm:$0xff]
  %v441 = vld [vmem:[%s3 + $0x40] sm:$0xff]
  %443 = vset.pattern.permute.xlu0 0
  %444 = vperm.xlu0 %443, %v439
  %v445 = vpop.permute.xlu0 %444
  %v447 = vmul.f32 %v445, %v24
  %v448 = vmul.f32 %v445, %v25
  %v449 = vmul.f32 %v445, %v26
  %v450 = vmul.f32 %v445, %v27
  %451 = vset.pattern.permute.xlu0 1
  %452 = vperm.xlu0 %451, %v439
  %v453 = vpop.permute.xlu0 %452
  %v455 = vmul.f32 %v453, %v35
  %v456 = vmul.f32 %v453, %v36
  %v457 = vmul.f32 %v453, %v37
  %v458 = vmul.f32 %v453, %v38
  %v459 = vadd.f32 %v447, %v455
  %v460 = vadd.f32 %v448, %v456
  %v461 = vadd.f32 %v449, %v457
  %v462 = vadd.f32 %v450, %v458
  %464 = vset.pattern.permute.xlu0 0
  %465 = vperm.xlu0 %464, %v440
  %v466 = vpop.permute.xlu0 %465
  %v468 = vadd.f32 %v459, %v466
  %v469 = vadd.f32 %v460, %v466
  %v470 = vadd.f32 %v461, %v466
  %v471 = vadd.f32 %v462, %v466
  %v472 = vmax.f32 %v468, 0.0
  %v473 = vmax.f32 %v469, 0.0
  %v474 = vmax.f32 %v470, 0.0
  %v475 = vmax.f32 %v471, 0.0
  %477 = vset.pattern.permute.xlu0 0
  %478 = vperm.xlu0 %477, %v441
  %v479 = vpop.permute.xlu0 %478
  %v481 = vmul.f32 %v472, %v479
  %v482 = vmul.f32 %v473, %v479
  %v483 = vmul.f32 %v474, %v479
  %v484 = vmul.f32 %v475, %v479
  %v485 = vadd.f32 %v435, %v481
  %v486 = vadd.f32 %v436, %v482
  %v487 = vadd.f32 %v437, %v483
  %v488 = vadd.f32 %v438, %v484
  %v489 = vld [vmem:[%s1 + $0x48] sm:$0xff]
  %v490 = vld [vmem:[%s2 + $0x48] sm:$0xff]
  %v491 = vld [vmem:[%s3 + $0x48] sm:$0xff]
  %493 = vset.pattern.permute.xlu0 0
  %494 = vperm.xlu0 %493, %v489
  %v495 = vpop.permute.xlu0 %494
  %v497 = vmul.f32 %v495, %v24
  %v498 = vmul.f32 %v495, %v25
  %v499 = vmul.f32 %v495, %v26
  %v500 = vmul.f32 %v495, %v27
  %501 = vset.pattern.permute.xlu0 1
  %502 = vperm.xlu0 %501, %v489
  %v503 = vpop.permute.xlu0 %502
  %v505 = vmul.f32 %v503, %v35
  %v506 = vmul.f32 %v503, %v36
  %v507 = vmul.f32 %v503, %v37
  %v508 = vmul.f32 %v503, %v38
  %v509 = vadd.f32 %v497, %v505
  %v510 = vadd.f32 %v498, %v506
  %v511 = vadd.f32 %v499, %v507
  %v512 = vadd.f32 %v500, %v508
  %514 = vset.pattern.permute.xlu0 0
  %515 = vperm.xlu0 %514, %v490
  %v516 = vpop.permute.xlu0 %515
  %v518 = vadd.f32 %v509, %v516
  %v519 = vadd.f32 %v510, %v516
  %v520 = vadd.f32 %v511, %v516
  %v521 = vadd.f32 %v512, %v516
  %v522 = vmax.f32 %v518, 0.0
  %v523 = vmax.f32 %v519, 0.0
  %v524 = vmax.f32 %v520, 0.0
  %v525 = vmax.f32 %v521, 0.0
  %527 = vset.pattern.permute.xlu0 0
  %528 = vperm.xlu0 %527, %v491
  %v529 = vpop.permute.xlu0 %528
  %v531 = vmul.f32 %v522, %v529
  %v532 = vmul.f32 %v523, %v529
  %v533 = vmul.f32 %v524, %v529
  %v534 = vmul.f32 %v525, %v529
  %v535 = vadd.f32 %v485, %v531
  %v536 = vadd.f32 %v486, %v532
  %v537 = vadd.f32 %v487, %v533
  %v538 = vadd.f32 %v488, %v534
  %v539 = vld [vmem:[%s1 + $0x50] sm:$0xff]
  %v540 = vld [vmem:[%s2 + $0x50] sm:$0xff]
  %v541 = vld [vmem:[%s3 + $0x50] sm:$0xff]
  %543 = vset.pattern.permute.xlu0 0
  %544 = vperm.xlu0 %543, %v539
  %v545 = vpop.permute.xlu0 %544
  %v547 = vmul.f32 %v545, %v24
  %v548 = vmul.f32 %v545, %v25
  %v549 = vmul.f32 %v545, %v26
  %v550 = vmul.f32 %v545, %v27
  %551 = vset.pattern.permute.xlu0 1
  %552 = vperm.xlu0 %551, %v539
  %v553 = vpop.permute.xlu0 %552
  %v555 = vmul.f32 %v553, %v35
  %v556 = vmul.f32 %v553, %v36
  %v557 = vmul.f32 %v553, %v37
  %v558 = vmul.f32 %v553, %v38
  %v559 = vadd.f32 %v547, %v555
  %v560 = vadd.f32 %v548, %v556
  %v561 = vadd.f32 %v549, %v557
  %v562 = vadd.f32 %v550, %v558
  %564 = vset.pattern.permute.xlu0 0
  %565 = vperm.xlu0 %564, %v540
  %v566 = vpop.permute.xlu0 %565
  %v568 = vadd.f32 %v559, %v566
  %v569 = vadd.f32 %v560, %v566
  %v570 = vadd.f32 %v561, %v566
  %v571 = vadd.f32 %v562, %v566
  %v572 = vmax.f32 %v568, 0.0
  %v573 = vmax.f32 %v569, 0.0
  %v574 = vmax.f32 %v570, 0.0
  %v575 = vmax.f32 %v571, 0.0
  %577 = vset.pattern.permute.xlu0 0
  %578 = vperm.xlu0 %577, %v541
  %v579 = vpop.permute.xlu0 %578
  %v581 = vmul.f32 %v572, %v579
  %v582 = vmul.f32 %v573, %v579
  %v583 = vmul.f32 %v574, %v579
  %v584 = vmul.f32 %v575, %v579
  %v585 = vadd.f32 %v535, %v581
  %v586 = vadd.f32 %v536, %v582
  %v587 = vadd.f32 %v537, %v583
  %v588 = vadd.f32 %v538, %v584
  %v589 = vld [vmem:[%s1 + $0x58] sm:$0xff]
  %v590 = vld [vmem:[%s2 + $0x58] sm:$0xff]
  %v591 = vld [vmem:[%s3 + $0x58] sm:$0xff]
  %593 = vset.pattern.permute.xlu0 0
  %594 = vperm.xlu0 %593, %v589
  %v595 = vpop.permute.xlu0 %594
  %v597 = vmul.f32 %v595, %v24
  %v598 = vmul.f32 %v595, %v25
  %v599 = vmul.f32 %v595, %v26
  %v600 = vmul.f32 %v595, %v27
  %601 = vset.pattern.permute.xlu0 1
  %602 = vperm.xlu0 %601, %v589
  %v603 = vpop.permute.xlu0 %602
  %v605 = vmul.f32 %v603, %v35
  %v606 = vmul.f32 %v603, %v36
  %v607 = vmul.f32 %v603, %v37
  %v608 = vmul.f32 %v603, %v38
  %v609 = vadd.f32 %v597, %v605
  %v610 = vadd.f32 %v598, %v606
  %v611 = vadd.f32 %v599, %v607
  %v612 = vadd.f32 %v600, %v608
  %614 = vset.pattern.permute.xlu0 0
  %615 = vperm.xlu0 %614, %v590
  %v616 = vpop.permute.xlu0 %615
  %v618 = vadd.f32 %v609, %v616
  %v619 = vadd.f32 %v610, %v616
  %v620 = vadd.f32 %v611, %v616
  %v621 = vadd.f32 %v612, %v616
  %v622 = vmax.f32 %v618, 0.0
  %v623 = vmax.f32 %v619, 0.0
  %v624 = vmax.f32 %v620, 0.0
  %v625 = vmax.f32 %v621, 0.0
  %627 = vset.pattern.permute.xlu0 0
  %628 = vperm.xlu0 %627, %v591
  %v629 = vpop.permute.xlu0 %628
  %v631 = vmul.f32 %v622, %v629
  %v632 = vmul.f32 %v623, %v629
  %v633 = vmul.f32 %v624, %v629
  %v634 = vmul.f32 %v625, %v629
  %v635 = vadd.f32 %v585, %v631
  %v636 = vadd.f32 %v586, %v632
  %v637 = vadd.f32 %v587, %v633
  %v638 = vadd.f32 %v588, %v634
  %v639 = vld [vmem:[%s1 + $0x60] sm:$0xff]
  %v640 = vld [vmem:[%s2 + $0x60] sm:$0xff]
  %v641 = vld [vmem:[%s3 + $0x60] sm:$0xff]
  %643 = vset.pattern.permute.xlu0 0
  %644 = vperm.xlu0 %643, %v639
  %v645 = vpop.permute.xlu0 %644
  %v647 = vmul.f32 %v645, %v24
  %v648 = vmul.f32 %v645, %v25
  %v649 = vmul.f32 %v645, %v26
  %v650 = vmul.f32 %v645, %v27
  %651 = vset.pattern.permute.xlu0 1
  %652 = vperm.xlu0 %651, %v639
  %v653 = vpop.permute.xlu0 %652
  %v655 = vmul.f32 %v653, %v35
  %v656 = vmul.f32 %v653, %v36
  %v657 = vmul.f32 %v653, %v37
  %v658 = vmul.f32 %v653, %v38
  %v659 = vadd.f32 %v647, %v655
  %v660 = vadd.f32 %v648, %v656
  %v661 = vadd.f32 %v649, %v657
  %v662 = vadd.f32 %v650, %v658
  %664 = vset.pattern.permute.xlu0 0
  %665 = vperm.xlu0 %664, %v640
  %v666 = vpop.permute.xlu0 %665
  %v668 = vadd.f32 %v659, %v666
  %v669 = vadd.f32 %v660, %v666
  %v670 = vadd.f32 %v661, %v666
  %v671 = vadd.f32 %v662, %v666
  %v672 = vmax.f32 %v668, 0.0
  %v673 = vmax.f32 %v669, 0.0
  %v674 = vmax.f32 %v670, 0.0
  %v675 = vmax.f32 %v671, 0.0
  %677 = vset.pattern.permute.xlu0 0
  %678 = vperm.xlu0 %677, %v641
  %v679 = vpop.permute.xlu0 %678
  %v681 = vmul.f32 %v672, %v679
  %v682 = vmul.f32 %v673, %v679
  %v683 = vmul.f32 %v674, %v679
  %v684 = vmul.f32 %v675, %v679
  %v685 = vadd.f32 %v635, %v681
  %v686 = vadd.f32 %v636, %v682
  %v687 = vadd.f32 %v637, %v683
  %v688 = vadd.f32 %v638, %v684
  %v689 = vld [vmem:[%s1 + $0x68] sm:$0xff]
  %v690 = vld [vmem:[%s2 + $0x68] sm:$0xff]
  %v691 = vld [vmem:[%s3 + $0x68] sm:$0xff]
  %693 = vset.pattern.permute.xlu0 0
  %694 = vperm.xlu0 %693, %v689
  %v695 = vpop.permute.xlu0 %694
  %v697 = vmul.f32 %v695, %v24
  %v698 = vmul.f32 %v695, %v25
  %v699 = vmul.f32 %v695, %v26
  %v700 = vmul.f32 %v695, %v27
  %701 = vset.pattern.permute.xlu0 1
  %702 = vperm.xlu0 %701, %v689
  %v703 = vpop.permute.xlu0 %702
  %v705 = vmul.f32 %v703, %v35
  %v706 = vmul.f32 %v703, %v36
  %v707 = vmul.f32 %v703, %v37
  %v708 = vmul.f32 %v703, %v38
  %v709 = vadd.f32 %v697, %v705
  %v710 = vadd.f32 %v698, %v706
  %v711 = vadd.f32 %v699, %v707
  %v712 = vadd.f32 %v700, %v708
  %714 = vset.pattern.permute.xlu0 0
  %715 = vperm.xlu0 %714, %v690
  %v716 = vpop.permute.xlu0 %715
  %v718 = vadd.f32 %v709, %v716
  %v719 = vadd.f32 %v710, %v716
  %v720 = vadd.f32 %v711, %v716
  %v721 = vadd.f32 %v712, %v716
  %v722 = vmax.f32 %v718, 0.0
  %v723 = vmax.f32 %v719, 0.0
  %v724 = vmax.f32 %v720, 0.0
  %v725 = vmax.f32 %v721, 0.0
  %727 = vset.pattern.permute.xlu0 0
  %728 = vperm.xlu0 %727, %v691
  %v729 = vpop.permute.xlu0 %728
  %v731 = vmul.f32 %v722, %v729
  %v732 = vmul.f32 %v723, %v729
  %v733 = vmul.f32 %v724, %v729
  %v734 = vmul.f32 %v725, %v729
  %v735 = vadd.f32 %v685, %v731
  %v736 = vadd.f32 %v686, %v732
  %v737 = vadd.f32 %v687, %v733
  %v738 = vadd.f32 %v688, %v734
  %v739 = vld [vmem:[%s1 + $0x70] sm:$0xff]
  %v740 = vld [vmem:[%s2 + $0x70] sm:$0xff]
  %v741 = vld [vmem:[%s3 + $0x70] sm:$0xff]
  %743 = vset.pattern.permute.xlu0 0
  %744 = vperm.xlu0 %743, %v739
  %v745 = vpop.permute.xlu0 %744
  %v747 = vmul.f32 %v745, %v24
  %v748 = vmul.f32 %v745, %v25
  %v749 = vmul.f32 %v745, %v26
  %v750 = vmul.f32 %v745, %v27
  %751 = vset.pattern.permute.xlu0 1
  %752 = vperm.xlu0 %751, %v739
  %v753 = vpop.permute.xlu0 %752
  %v755 = vmul.f32 %v753, %v35
  %v756 = vmul.f32 %v753, %v36
  %v757 = vmul.f32 %v753, %v37
  %v758 = vmul.f32 %v753, %v38
  %v759 = vadd.f32 %v747, %v755
  %v760 = vadd.f32 %v748, %v756
  %v761 = vadd.f32 %v749, %v757
  %v762 = vadd.f32 %v750, %v758
  %764 = vset.pattern.permute.xlu0 0
  %765 = vperm.xlu0 %764, %v740
  %v766 = vpop.permute.xlu0 %765
  %v768 = vadd.f32 %v759, %v766
  %v769 = vadd.f32 %v760, %v766
  %v770 = vadd.f32 %v761, %v766
  %v771 = vadd.f32 %v762, %v766
  %v772 = vmax.f32 %v768, 0.0
  %v773 = vmax.f32 %v769, 0.0
  %v774 = vmax.f32 %v770, 0.0
  %v775 = vmax.f32 %v771, 0.0
  %777 = vset.pattern.permute.xlu0 0
  %778 = vperm.xlu0 %777, %v741
  %v779 = vpop.permute.xlu0 %778
  %v781 = vmul.f32 %v772, %v779
  %v782 = vmul.f32 %v773, %v779
  %v783 = vmul.f32 %v774, %v779
  %v784 = vmul.f32 %v775, %v779
  %v785 = vadd.f32 %v735, %v781
  %v786 = vadd.f32 %v736, %v782
  %v787 = vadd.f32 %v737, %v783
  %v788 = vadd.f32 %v738, %v784
  %v789 = vld [vmem:[%s1 + $0x78] sm:$0xff]
  %v790 = vld [vmem:[%s2 + $0x78] sm:$0xff]
  %v791 = vld [vmem:[%s3 + $0x78] sm:$0xff]
  %793 = vset.pattern.permute.xlu0 0
  %794 = vperm.xlu0 %793, %v789
  %v795 = vpop.permute.xlu0 %794
  %v797 = vmul.f32 %v795, %v24
  %v798 = vmul.f32 %v795, %v25
  %v799 = vmul.f32 %v795, %v26
  %v800 = vmul.f32 %v795, %v27
  %801 = vset.pattern.permute.xlu0 1
  %802 = vperm.xlu0 %801, %v789
  %v803 = vpop.permute.xlu0 %802
  %v805 = vmul.f32 %v803, %v35
  %v806 = vmul.f32 %v803, %v36
  %v807 = vmul.f32 %v803, %v37
  %v808 = vmul.f32 %v803, %v38
  %v809 = vadd.f32 %v797, %v805
  %v810 = vadd.f32 %v798, %v806
  %v811 = vadd.f32 %v799, %v807
  %v812 = vadd.f32 %v800, %v808
  %814 = vset.pattern.permute.xlu0 0
  %815 = vperm.xlu0 %814, %v790
  %v816 = vpop.permute.xlu0 %815
  %v818 = vadd.f32 %v809, %v816
  %v819 = vadd.f32 %v810, %v816
  %v820 = vadd.f32 %v811, %v816
  %v821 = vadd.f32 %v812, %v816
  %v822 = vmax.f32 %v818, 0.0
  %v823 = vmax.f32 %v819, 0.0
  %v824 = vmax.f32 %v820, 0.0
  %v825 = vmax.f32 %v821, 0.0
  %827 = vset.pattern.permute.xlu0 0
  %828 = vperm.xlu0 %827, %v791
  %v829 = vpop.permute.xlu0 %828
  %v831 = vmul.f32 %v822, %v829
  %v832 = vmul.f32 %v823, %v829
  %v833 = vmul.f32 %v824, %v829
  %v834 = vmul.f32 %v825, %v829
  %v835 = vadd.f32 %v785, %v831
  %v836 = vadd.f32 %v786, %v832
  %v837 = vadd.f32 %v787, %v833
  %v838 = vadd.f32 %v788, %v834
  %v839 = vld [vmem:[%s1 + $0x80] sm:$0xff]
  %v840 = vld [vmem:[%s2 + $0x80] sm:$0xff]
  %v841 = vld [vmem:[%s3 + $0x80] sm:$0xff]
  %843 = vset.pattern.permute.xlu0 0
  %844 = vperm.xlu0 %843, %v839
  %v845 = vpop.permute.xlu0 %844
  %v847 = vmul.f32 %v845, %v24
  %v848 = vmul.f32 %v845, %v25
  %v849 = vmul.f32 %v845, %v26
  %v850 = vmul.f32 %v845, %v27
  %851 = vset.pattern.permute.xlu0 1
  %852 = vperm.xlu0 %851, %v839
  %v853 = vpop.permute.xlu0 %852
  %v855 = vmul.f32 %v853, %v35
  %v856 = vmul.f32 %v853, %v36
  %v857 = vmul.f32 %v853, %v37
  %v858 = vmul.f32 %v853, %v38
  %v859 = vadd.f32 %v847, %v855
  %v860 = vadd.f32 %v848, %v856
  %v861 = vadd.f32 %v849, %v857
  %v862 = vadd.f32 %v850, %v858
  %864 = vset.pattern.permute.xlu0 0
  %865 = vperm.xlu0 %864, %v840
  %v866 = vpop.permute.xlu0 %865
  %v868 = vadd.f32 %v859, %v866
  %v869 = vadd.f32 %v860, %v866
  %v870 = vadd.f32 %v861, %v866
  %v871 = vadd.f32 %v862, %v866
  %v872 = vmax.f32 %v868, 0.0
  %v873 = vmax.f32 %v869, 0.0
  %v874 = vmax.f32 %v870, 0.0
  %v875 = vmax.f32 %v871, 0.0
  %877 = vset.pattern.permute.xlu0 0
  %878 = vperm.xlu0 %877, %v841
  %v879 = vpop.permute.xlu0 %878
  %v881 = vmul.f32 %v872, %v879
  %v882 = vmul.f32 %v873, %v879
  %v883 = vmul.f32 %v874, %v879
  %v884 = vmul.f32 %v875, %v879
  %v885 = vadd.f32 %v835, %v881
  %v886 = vadd.f32 %v836, %v882
  %v887 = vadd.f32 %v837, %v883
  %v888 = vadd.f32 %v838, %v884
  %v889 = vld [vmem:[%s1 + $0x88] sm:$0xff]
  %v890 = vld [vmem:[%s2 + $0x88] sm:$0xff]
  %v891 = vld [vmem:[%s3 + $0x88] sm:$0xff]
  %893 = vset.pattern.permute.xlu0 0
  %894 = vperm.xlu0 %893, %v889
  %v895 = vpop.permute.xlu0 %894
  %v897 = vmul.f32 %v895, %v24
  %v898 = vmul.f32 %v895, %v25
  %v899 = vmul.f32 %v895, %v26
  %v900 = vmul.f32 %v895, %v27
  %901 = vset.pattern.permute.xlu0 1
  %902 = vperm.xlu0 %901, %v889
  %v903 = vpop.permute.xlu0 %902
  %v905 = vmul.f32 %v903, %v35
  %v906 = vmul.f32 %v903, %v36
  %v907 = vmul.f32 %v903, %v37
  %v908 = vmul.f32 %v903, %v38
  %v909 = vadd.f32 %v897, %v905
  %v910 = vadd.f32 %v898, %v906
  %v911 = vadd.f32 %v899, %v907
  %v912 = vadd.f32 %v900, %v908
  %914 = vset.pattern.permute.xlu0 0
  %915 = vperm.xlu0 %914, %v890
  %v916 = vpop.permute.xlu0 %915
  %v918 = vadd.f32 %v909, %v916
  %v919 = vadd.f32 %v910, %v916
  %v920 = vadd.f32 %v911, %v916
  %v921 = vadd.f32 %v912, %v916
  %v922 = vmax.f32 %v918, 0.0
  %v923 = vmax.f32 %v919, 0.0
  %v924 = vmax.f32 %v920, 0.0
  %v925 = vmax.f32 %v921, 0.0
  %927 = vset.pattern.permute.xlu0 0
  %928 = vperm.xlu0 %927, %v891
  %v929 = vpop.permute.xlu0 %928
  %v931 = vmul.f32 %v922, %v929
  %v932 = vmul.f32 %v923, %v929
  %v933 = vmul.f32 %v924, %v929
  %v934 = vmul.f32 %v925, %v929
  %v935 = vadd.f32 %v885, %v931
  %v936 = vadd.f32 %v886, %v932
  %v937 = vadd.f32 %v887, %v933
  %v938 = vadd.f32 %v888, %v934
  %v939 = vld [vmem:[%s1 + $0x90] sm:$0xff]
  %v940 = vld [vmem:[%s2 + $0x90] sm:$0xff]
  %v941 = vld [vmem:[%s3 + $0x90] sm:$0xff]
  %943 = vset.pattern.permute.xlu0 0
  %944 = vperm.xlu0 %943, %v939
  %v945 = vpop.permute.xlu0 %944
  %v947 = vmul.f32 %v945, %v24
  %v948 = vmul.f32 %v945, %v25
  %v949 = vmul.f32 %v945, %v26
  %v950 = vmul.f32 %v945, %v27
  %951 = vset.pattern.permute.xlu0 1
  %952 = vperm.xlu0 %951, %v939
  %v953 = vpop.permute.xlu0 %952
  %v955 = vmul.f32 %v953, %v35
  %v956 = vmul.f32 %v953, %v36
  %v957 = vmul.f32 %v953, %v37
  %v958 = vmul.f32 %v953, %v38
  %v959 = vadd.f32 %v947, %v955
  %v960 = vadd.f32 %v948, %v956
  %v961 = vadd.f32 %v949, %v957
  %v962 = vadd.f32 %v950, %v958
  %964 = vset.pattern.permute.xlu0 0
  %965 = vperm.xlu0 %964, %v940
  %v966 = vpop.permute.xlu0 %965
  %v968 = vadd.f32 %v959, %v966
  %v969 = vadd.f32 %v960, %v966
  %v970 = vadd.f32 %v961, %v966
  %v971 = vadd.f32 %v962, %v966
  %v972 = vmax.f32 %v968, 0.0
  %v973 = vmax.f32 %v969, 0.0
  %v974 = vmax.f32 %v970, 0.0
  %v975 = vmax.f32 %v971, 0.0
  %977 = vset.pattern.permute.xlu0 0
  %978 = vperm.xlu0 %977, %v941
  %v979 = vpop.permute.xlu0 %978
  %v981 = vmul.f32 %v972, %v979
  %v982 = vmul.f32 %v973, %v979
  %v983 = vmul.f32 %v974, %v979
  %v984 = vmul.f32 %v975, %v979
  %v985 = vadd.f32 %v935, %v981
  %v986 = vadd.f32 %v936, %v982
  %v987 = vadd.f32 %v937, %v983
  %v988 = vadd.f32 %v938, %v984
  %v989 = vld [vmem:[%s1 + $0x98] sm:$0xff]
  %v990 = vld [vmem:[%s2 + $0x98] sm:$0xff]
  %v991 = vld [vmem:[%s3 + $0x98] sm:$0xff]
  %993 = vset.pattern.permute.xlu0 0
  %994 = vperm.xlu0 %993, %v989
  %v995 = vpop.permute.xlu0 %994
  %v997 = vmul.f32 %v995, %v24
  %v998 = vmul.f32 %v995, %v25
  %v999 = vmul.f32 %v995, %v26
  %v1000 = vmul.f32 %v995, %v27
  %1001 = vset.pattern.permute.xlu0 1
  %1002 = vperm.xlu0 %1001, %v989
  %v1003 = vpop.permute.xlu0 %1002
  %v1005 = vmul.f32 %v1003, %v35
  %v1006 = vmul.f32 %v1003, %v36
  %v1007 = vmul.f32 %v1003, %v37
  %v1008 = vmul.f32 %v1003, %v38
  %v1009 = vadd.f32 %v997, %v1005
  %v1010 = vadd.f32 %v998, %v1006
  %v1011 = vadd.f32 %v999, %v1007
  %v1012 = vadd.f32 %v1000, %v1008
  %1014 = vset.pattern.permute.xlu0 0
  %1015 = vperm.xlu0 %1014, %v990
  %v1016 = vpop.permute.xlu0 %1015
  %v1018 = vadd.f32 %v1009, %v1016
  %v1019 = vadd.f32 %v1010, %v1016
  %v1020 = vadd.f32 %v1011, %v1016
  %v1021 = vadd.f32 %v1012, %v1016
  %v1022 = vmax.f32 %v1018, 0.0
  %v1023 = vmax.f32 %v1019, 0.0
  %v1024 = vmax.f32 %v1020, 0.0
  %v1025 = vmax.f32 %v1021, 0.0
  %1027 = vset.pattern.permute.xlu0 0
  %1028 = vperm.xlu0 %1027, %v991
  %v1029 = vpop.permute.xlu0 %1028
  %v1031 = vmul.f32 %v1022, %v1029
  %v1032 = vmul.f32 %v1023, %v1029
  %v1033 = vmul.f32 %v1024, %v1029
  %v1034 = vmul.f32 %v1025, %v1029
  %v1035 = vadd.f32 %v985, %v1031
  %v1036 = vadd.f32 %v986, %v1032
  %v1037 = vadd.f32 %v987, %v1033
  %v1038 = vadd.f32 %v988, %v1034
  %v1039 = vld [vmem:[%s1 + $0xa0] sm:$0xff]
  %v1040 = vld [vmem:[%s2 + $0xa0] sm:$0xff]
  %v1041 = vld [vmem:[%s3 + $0xa0] sm:$0xff]
  %1043 = vset.pattern.permute.xlu0 0
  %1044 = vperm.xlu0 %1043, %v1039
  %v1045 = vpop.permute.xlu0 %1044
  %v1047 = vmul.f32 %v1045, %v24
  %v1048 = vmul.f32 %v1045, %v25
  %v1049 = vmul.f32 %v1045, %v26
  %v1050 = vmul.f32 %v1045, %v27
  %1051 = vset.pattern.permute.xlu0 1
  %1052 = vperm.xlu0 %1051, %v1039
  %v1053 = vpop.permute.xlu0 %1052
  %v1055 = vmul.f32 %v1053, %v35
  %v1056 = vmul.f32 %v1053, %v36
  %v1057 = vmul.f32 %v1053, %v37
  %v1058 = vmul.f32 %v1053, %v38
  %v1059 = vadd.f32 %v1047, %v1055
  %v1060 = vadd.f32 %v1048, %v1056
  %v1061 = vadd.f32 %v1049, %v1057
  %v1062 = vadd.f32 %v1050, %v1058
  %1064 = vset.pattern.permute.xlu0 0
  %1065 = vperm.xlu0 %1064, %v1040
  %v1066 = vpop.permute.xlu0 %1065
  %v1068 = vadd.f32 %v1059, %v1066
  %v1069 = vadd.f32 %v1060, %v1066
  %v1070 = vadd.f32 %v1061, %v1066
  %v1071 = vadd.f32 %v1062, %v1066
  %v1072 = vmax.f32 %v1068, 0.0
  %v1073 = vmax.f32 %v1069, 0.0
  %v1074 = vmax.f32 %v1070, 0.0
  %v1075 = vmax.f32 %v1071, 0.0
  %1077 = vset.pattern.permute.xlu0 0
  %1078 = vperm.xlu0 %1077, %v1041
  %v1079 = vpop.permute.xlu0 %1078
  %v1081 = vmul.f32 %v1072, %v1079
  %v1082 = vmul.f32 %v1073, %v1079
  %v1083 = vmul.f32 %v1074, %v1079
  %v1084 = vmul.f32 %v1075, %v1079
  %v1085 = vadd.f32 %v1035, %v1081
  %v1086 = vadd.f32 %v1036, %v1082
  %v1087 = vadd.f32 %v1037, %v1083
  %v1088 = vadd.f32 %v1038, %v1084
  %v1089 = vld [vmem:[%s1 + $0xa8] sm:$0xff]
  %v1090 = vld [vmem:[%s2 + $0xa8] sm:$0xff]
  %v1091 = vld [vmem:[%s3 + $0xa8] sm:$0xff]
  %1093 = vset.pattern.permute.xlu0 0
  %1094 = vperm.xlu0 %1093, %v1089
  %v1095 = vpop.permute.xlu0 %1094
  %v1097 = vmul.f32 %v1095, %v24
  %v1098 = vmul.f32 %v1095, %v25
  %v1099 = vmul.f32 %v1095, %v26
  %v1100 = vmul.f32 %v1095, %v27
  %1101 = vset.pattern.permute.xlu0 1
  %1102 = vperm.xlu0 %1101, %v1089
  %v1103 = vpop.permute.xlu0 %1102
  %v1105 = vmul.f32 %v1103, %v35
  %v1106 = vmul.f32 %v1103, %v36
  %v1107 = vmul.f32 %v1103, %v37
  %v1108 = vmul.f32 %v1103, %v38
  %v1109 = vadd.f32 %v1097, %v1105
  %v1110 = vadd.f32 %v1098, %v1106
  %v1111 = vadd.f32 %v1099, %v1107
  %v1112 = vadd.f32 %v1100, %v1108
  %1114 = vset.pattern.permute.xlu0 0
  %1115 = vperm.xlu0 %1114, %v1090
  %v1116 = vpop.permute.xlu0 %1115
  %v1118 = vadd.f32 %v1109, %v1116
  %v1119 = vadd.f32 %v1110, %v1116
  %v1120 = vadd.f32 %v1111, %v1116
  %v1121 = vadd.f32 %v1112, %v1116
  %v1122 = vmax.f32 %v1118, 0.0
  %v1123 = vmax.f32 %v1119, 0.0
  %v1124 = vmax.f32 %v1120, 0.0
  %v1125 = vmax.f32 %v1121, 0.0
  %1127 = vset.pattern.permute.xlu0 0
  %1128 = vperm.xlu0 %1127, %v1091
  %v1129 = vpop.permute.xlu0 %1128
  %v1131 = vmul.f32 %v1122, %v1129
  %v1132 = vmul.f32 %v1123, %v1129
  %v1133 = vmul.f32 %v1124, %v1129
  %v1134 = vmul.f32 %v1125, %v1129
  %v1135 = vadd.f32 %v1085, %v1131
  %v1136 = vadd.f32 %v1086, %v1132
  %v1137 = vadd.f32 %v1087, %v1133
  %v1138 = vadd.f32 %v1088, %v1134
  %v1139 = vld [vmem:[%s1 + $0xb0] sm:$0xff]
  %v1140 = vld [vmem:[%s2 + $0xb0] sm:$0xff]
  %v1141 = vld [vmem:[%s3 + $0xb0] sm:$0xff]
  %1143 = vset.pattern.permute.xlu0 0
  %1144 = vperm.xlu0 %1143, %v1139
  %v1145 = vpop.permute.xlu0 %1144
  %v1147 = vmul.f32 %v1145, %v24
  %v1148 = vmul.f32 %v1145, %v25
  %v1149 = vmul.f32 %v1145, %v26
  %v1150 = vmul.f32 %v1145, %v27
  %1151 = vset.pattern.permute.xlu0 1
  %1152 = vperm.xlu0 %1151, %v1139
  %v1153 = vpop.permute.xlu0 %1152
  %v1155 = vmul.f32 %v1153, %v35
  %v1156 = vmul.f32 %v1153, %v36
  %v1157 = vmul.f32 %v1153, %v37
  %v1158 = vmul.f32 %v1153, %v38
  %v1159 = vadd.f32 %v1147, %v1155
  %v1160 = vadd.f32 %v1148, %v1156
  %v1161 = vadd.f32 %v1149, %v1157
  %v1162 = vadd.f32 %v1150, %v1158
  %1164 = vset.pattern.permute.xlu0 0
  %1165 = vperm.xlu0 %1164, %v1140
  %v1166 = vpop.permute.xlu0 %1165
  %v1168 = vadd.f32 %v1159, %v1166
  %v1169 = vadd.f32 %v1160, %v1166
  %v1170 = vadd.f32 %v1161, %v1166
  %v1171 = vadd.f32 %v1162, %v1166
  %v1172 = vmax.f32 %v1168, 0.0
  %v1173 = vmax.f32 %v1169, 0.0
  %v1174 = vmax.f32 %v1170, 0.0
  %v1175 = vmax.f32 %v1171, 0.0
  %1177 = vset.pattern.permute.xlu0 0
  %1178 = vperm.xlu0 %1177, %v1141
  %v1179 = vpop.permute.xlu0 %1178
  %v1181 = vmul.f32 %v1172, %v1179
  %v1182 = vmul.f32 %v1173, %v1179
  %v1183 = vmul.f32 %v1174, %v1179
  %v1184 = vmul.f32 %v1175, %v1179
  %v1185 = vadd.f32 %v1135, %v1181
  %v1186 = vadd.f32 %v1136, %v1182
  %v1187 = vadd.f32 %v1137, %v1183
  %v1188 = vadd.f32 %v1138, %v1184
  %v1189 = vld [vmem:[%s1 + $0xb8] sm:$0xff]
  %v1190 = vld [vmem:[%s2 + $0xb8] sm:$0xff]
  %v1191 = vld [vmem:[%s3 + $0xb8] sm:$0xff]
  %1193 = vset.pattern.permute.xlu0 0
  %1194 = vperm.xlu0 %1193, %v1189
  %v1195 = vpop.permute.xlu0 %1194
  %v1197 = vmul.f32 %v1195, %v24
  %v1198 = vmul.f32 %v1195, %v25
  %v1199 = vmul.f32 %v1195, %v26
  %v1200 = vmul.f32 %v1195, %v27
  %1201 = vset.pattern.permute.xlu0 1
  %1202 = vperm.xlu0 %1201, %v1189
  %v1203 = vpop.permute.xlu0 %1202
  %v1205 = vmul.f32 %v1203, %v35
  %v1206 = vmul.f32 %v1203, %v36
  %v1207 = vmul.f32 %v1203, %v37
  %v1208 = vmul.f32 %v1203, %v38
  %v1209 = vadd.f32 %v1197, %v1205
  %v1210 = vadd.f32 %v1198, %v1206
  %v1211 = vadd.f32 %v1199, %v1207
  %v1212 = vadd.f32 %v1200, %v1208
  %1214 = vset.pattern.permute.xlu0 0
  %1215 = vperm.xlu0 %1214, %v1190
  %v1216 = vpop.permute.xlu0 %1215
  %v1218 = vadd.f32 %v1209, %v1216
  %v1219 = vadd.f32 %v1210, %v1216
  %v1220 = vadd.f32 %v1211, %v1216
  %v1221 = vadd.f32 %v1212, %v1216
  %v1222 = vmax.f32 %v1218, 0.0
  %v1223 = vmax.f32 %v1219, 0.0
  %v1224 = vmax.f32 %v1220, 0.0
  %v1225 = vmax.f32 %v1221, 0.0
  %1227 = vset.pattern.permute.xlu0 0
  %1228 = vperm.xlu0 %1227, %v1191
  %v1229 = vpop.permute.xlu0 %1228
  %v1231 = vmul.f32 %v1222, %v1229
  %v1232 = vmul.f32 %v1223, %v1229
  %v1233 = vmul.f32 %v1224, %v1229
  %v1234 = vmul.f32 %v1225, %v1229
  %v1235 = vadd.f32 %v1185, %v1231
  %v1236 = vadd.f32 %v1186, %v1232
  %v1237 = vadd.f32 %v1187, %v1233
  %v1238 = vadd.f32 %v1188, %v1234
  %v1239 = vld [vmem:[%s1 + $0xc0] sm:$0xff]
  %v1240 = vld [vmem:[%s2 + $0xc0] sm:$0xff]
  %v1241 = vld [vmem:[%s3 + $0xc0] sm:$0xff]
  %1243 = vset.pattern.permute.xlu0 0
  %1244 = vperm.xlu0 %1243, %v1239
  %v1245 = vpop.permute.xlu0 %1244
  %v1247 = vmul.f32 %v1245, %v24
  %v1248 = vmul.f32 %v1245, %v25
  %v1249 = vmul.f32 %v1245, %v26
  %v1250 = vmul.f32 %v1245, %v27
  %1251 = vset.pattern.permute.xlu0 1
  %1252 = vperm.xlu0 %1251, %v1239
  %v1253 = vpop.permute.xlu0 %1252
  %v1255 = vmul.f32 %v1253, %v35
  %v1256 = vmul.f32 %v1253, %v36
  %v1257 = vmul.f32 %v1253, %v37
  %v1258 = vmul.f32 %v1253, %v38
  %v1259 = vadd.f32 %v1247, %v1255
  %v1260 = vadd.f32 %v1248, %v1256
  %v1261 = vadd.f32 %v1249, %v1257
  %v1262 = vadd.f32 %v1250, %v1258
  %1264 = vset.pattern.permute.xlu0 0
  %1265 = vperm.xlu0 %1264, %v1240
  %v1266 = vpop.permute.xlu0 %1265
  %v1268 = vadd.f32 %v1259, %v1266
  %v1269 = vadd.f32 %v1260, %v1266
  %v1270 = vadd.f32 %v1261, %v1266
  %v1271 = vadd.f32 %v1262, %v1266
  %v1272 = vmax.f32 %v1268, 0.0
  %v1273 = vmax.f32 %v1269, 0.0
  %v1274 = vmax.f32 %v1270, 0.0
  %v1275 = vmax.f32 %v1271, 0.0
  %1277 = vset.pattern.permute.xlu0 0
  %1278 = vperm.xlu0 %1277, %v1241
  %v1279 = vpop.permute.xlu0 %1278
  %v1281 = vmul.f32 %v1272, %v1279
  %v1282 = vmul.f32 %v1273, %v1279
  %v1283 = vmul.f32 %v1274, %v1279
  %v1284 = vmul.f32 %v1275, %v1279
  %v1285 = vadd.f32 %v1235, %v1281
  %v1286 = vadd.f32 %v1236, %v1282
  %v1287 = vadd.f32 %v1237, %v1283
  %v1288 = vadd.f32 %v1238, %v1284
  %v1289 = vrot.slane %v1285, 4
  %v1290 = vadd.f32 %v1285, %v1289
  %v1291 = vrot.slane %v1290, 2
  %v1292 = vadd.f32 %v1290, %v1291
  %v1293 = vrot.slane %v1292, 1
  %v1294 = vadd.f32 %v1292, %v1293
  %v1295 = vrot.slane %v1286, 4
  %v1296 = vadd.f32 %v1286, %v1295
  %v1297 = vrot.slane %v1296, 2
  %v1298 = vadd.f32 %v1296, %v1297
  %v1299 = vrot.slane %v1298, 1
  %v1300 = vadd.f32 %v1298, %v1299
  %v1301 = vrot.slane %v1287, 4
  %v1302 = vadd.f32 %v1287, %v1301
  %v1303 = vrot.slane %v1302, 2
  %v1304 = vadd.f32 %v1302, %v1303
  %v1305 = vrot.slane %v1304, 1
  %v1306 = vadd.f32 %v1304, %v1305
  %v1307 = vrot.slane %v1288, 4
  %v1308 = vadd.f32 %v1288, %v1307
  %v1309 = vrot.slane %v1308, 2
  %v1310 = vadd.f32 %v1308, %v1309
  %v1311 = vrot.slane %v1310, 1
  %v1312 = vadd.f32 %v1310, %v1311
  %v1313 = vld [vmem:[#allocation2] sm:$0x1]
  %1315 = vset.pattern.permute.xlu0 0
  %1316 = vperm.xlu0 %1315, %v1313
  %v1317 = vpop.permute.xlu0 %1316
  %v1319 = vperm.slane %v1317, 0
  %v1320 = vadd.f32 %v1294, %v1319
  %v1321 = vadd.f32 %v1300, %v1319
  %v1322 = vadd.f32 %v1306, %v1319
  %v1323 = vadd.f32 %v1312, %v1319
  %v1328 = vrot.slane %v1321, 7
  %v1329 = vrot.slane %v1322, 6
  %v1330 = vrot.slane %v1323, 5
  %vm1331 = vcmask 1040384
  %v1332 = vsel %vm1331, %v1320, %v1328
  %vm1333 = vcmask 1042434
  %v1334 = vsel %vm1333, %v1329, %v1330
  %vm1335 = vcmask 1041408
  %v1336 = vsel %vm1335, %v1332, %v1334
  %v1338 = vlaneseq
  %vm1339 = vcmp.ge.s32.totalorder %v1338, 0
  %vm1340 = vcmp.lt.s32.totalorder %v1338, 512
  %vm1341 = vmand %vm1339, %vm1340
  %1342 = vst.msk [vmem:[%s5] sm:$0xf] %vm1341, %v1336
  // Predicated region
  $region22: #{network_forward.1} parent=0 // pred_check
    _
  $region23: #{network_forward.1} parent=0 // pred_check_branch
    %1344 = sbr.rel (0) target = $region25
  $region24: #{network_forward.1} parent=0 // pred_region
    _
  $region25: #{network_forward.1} parent=0 // pred_fallthru
    _
  // Predicated region
  $region26: #{network_forward.1} parent=0 // pred_check
    _
  $region27: #{network_forward.1} parent=0 // pred_check_branch
    %1346 = sbr.rel (0) target = $region29
  $region28: #{network_forward.1} parent=0 // pred_region
    _
  $region29: #{network_forward.1} parent=0 // pred_fallthru
    _

</llo_original>
